<compile_context>
chip_gen: v5e
topology: v5e:2x2
jax: 0.10.0
libtpu: 0.0.40
codegen_flags: <defaults>
</compile_context>

<pallas_src>
import functools

import jax
import jax.numpy as jnp
from jax.experimental import pallas as pl
from jax.experimental.pallas import tpu as pltpu


def _round_up(x, m):
    return ((x + m - 1) // m) * m


# ----------------------------------------------------------------------------
# Fused forward kernel (one grid step = one image)
# ----------------------------------------------------------------------------
def _fused_forward_kernel(a1_ref, mask_ref,
                          w1_ref, w2_ref, b2_ref,
                          wl1_ref, wl2_ref, bl_ref,
                          wd_ref, bd_ref, wh_ref, bh_ref,
                          out_ref, *, hb, wb):
    """Encoder -> FPN decoder -> header, fully fused in VMEM.

    hb, wb: spatial size of the stride-4 feature map (= H/4, W/4).
    Per-phase slab: zero-padded (hb+2, wb+2) grid flattened row-major to
    (L, C); f1 phase blocks additionally carry G leading zero guard rows so
    that every tap slice stays in-bounds.  Border / guard rows are exact
    zeros (the convs' zero padding); "wide" garbage rows produced at pad
    positions are masked and never read back at valid positions.
    """
    wpad = wb + 2                       # row length of a padded phase grid
    L = (hb + 2) * wpad                 # rows per phase slab
    G = wb + 3                          # guard rows (largest negative offset)
    PB = G + L                          # rows per f1 phase block

    # ---------------- encoder stage 1: 3x3 / s2 conv + ReLU ----------------
    # Wrapper supplies the phase-ordered patch matrix with a bias column, so
    # pad/guard rows stay exactly zero after ReLU.  One bf16 MXU matmul.
    f1 = jnp.dot(a1_ref[0], w1_ref[...], preferred_element_type=jnp.float32)
    f1 = jnp.maximum(f1, 0.0).astype(jnp.bfloat16)            # (4*PB, C1)

    # ---------------- encoder stage 2: 3x3 / s2 conv + ReLU ----------------
    # In-VMEM im2col over the f1 phase slabs: 9 contiguous static row slices.
    taps = []
    for di in range(3):
        rr = 0 if di == 0 else 1
        pr = (di + 1) % 2
        for dj in range(3):
            cc = 0 if dj == 0 else 1
            pc = (dj + 1) % 2
            start = (pr * 2 + pc) * PB + G + (rr - 1) * wpad + (cc - 1)
            taps.append(f1[start:start + L, :])
    a2 = jnp.concatenate(taps, axis=1)                         # (L, 9*C1)
    f2 = jnp.dot(a2, w2_ref[...], preferred_element_type=jnp.float32)
    f2 = jnp.maximum(f2 + b2_ref[...], 0.0)                    # (L, C2)

    # -------- FPN decoder: 1x1 laterals + (free) 2x upsample + add ---------
    # lateral-2 runs at the low resolution (conv1x1 and nearest upsample
    # commute); in phase space the 2x nearest upsample is just "add the same
    # low-res map to every phase", so it costs nothing.
    lat2 = jnp.dot(f2.astype(jnp.bfloat16), wl2_ref[...],
                   preferred_element_type=jnp.float32)         # (L, Cd)
    lat1 = jnp.dot(f1, wl1_ref[...],
                   preferred_element_type=jnp.float32)         # (4*PB, Cd)
    mask = mask_ref[...]                                       # (L, 1)
    cd = bl_ref.shape[1]
    gz = jnp.zeros((G, cd), jnp.bfloat16)
    merged = []                                                # guarded slabs
    for p in range(4):
        m = lat1[p * PB + G:p * PB + G + L, :] + lat2 + bl_ref[...]
        merged.append(jnp.concatenate(
            [gz, (m * mask).astype(jnp.bfloat16), gz], axis=0))  # (L+2G, Cd)

    # -------- decoder 3x3/s1 conv + ReLU fused with the 1x1 header ---------
    for pr in range(2):
        for pc in range(2):
            taps = []
            for ta in range(3):
                prs = (pr + ta - 1) % 2
                dr = (pr + ta - 1) // 2
                for tb in range(3):
                    pcs = (pc + tb - 1) % 2
                    dc = (pc + tb - 1) // 2
                    src = merged[prs * 2 + pcs]
                    start = G + dr * wpad + dc
                    taps.append(src[start:start + L, :])
            ad = jnp.concatenate(taps, axis=1)                 # (L, 9*Cd)
            dec = jnp.dot(ad, wd_ref[...], preferred_element_type=jnp.float32)
            dec = jnp.maximum(dec + bd_ref[...], 0.0)
            logits = jnp.dot(dec.astype(jnp.bfloat16), wh_ref[...],
                             preferred_element_type=jnp.float32) + bh_ref[...]
            out_ref[0, pr * 2 + pc] = logits                   # (L, nc)


# ----------------------------------------------------------------------------
# Host-side helpers (weight packing, wrapper glue)
# ----------------------------------------------------------------------------
def _init_conv(key, cout, cin, kh, kw):
    k1, k2 = jax.random.split(key)
    fan_in = cin * kh * kw
    w = jax.random.normal(k1, (cout, cin, kh, kw), jnp.float32) / jnp.sqrt(fan_in)
    b = 0.01 * jax.random.normal(k2, (cout,), jnp.float32)
    return w, b


def _pack_conv(w_oihw, bias=None, rows_to=None):
    """(Cout, Cin, KH, KW) -> ((KH*KW*Cin [+1 bias row]), Cout) bf16.

    Real channel counts -- no 128-lane padding of the contraction dim.
    """
    cout, cin, kh, kw = w_oihw.shape
    w = jnp.transpose(w_oihw, (2, 3, 1, 0)).reshape(kh * kw * cin, cout)
    if bias is not None:
        w = jnp.concatenate([w, bias.reshape(1, cout)], axis=0)
    if rows_to is not None and rows_to > w.shape[0]:
        w = jnp.pad(w, ((0, rows_to - w.shape[0]), (0, 0)))
    return w.astype(jnp.bfloat16)


def _build_phase_patches(x_nhwc, hb, wb, k_to):
    """Phase-ordered, zero-padded & guarded patch matrix for the first conv.

    Row layout per phase (pr, pc): [wb+3 zero guard rows] ++ [(hb+2)*(wb+2)
    padded-grid rows], where grid row r*(wb+2)+c holds the 3x3 patch (plus a
    bias-1 column) of encoder-1 output position (2*(r-1)+pr, 2*(c-1)+pc) for
    interior r, c and zeros on the border (doubling as conv-2's zero pad).
    """
    n, h, w, cin = x_nhwc.shape
    h1, w1 = 2 * hb, 2 * wb
    xp = jnp.pad(x_nhwc, ((0, 0), (1, 1), (1, 1), (0, 0)))
    taps = [xp[:, di:di + 2 * h1:2, dj:dj + 2 * w1:2, :]
            for di in range(3) for dj in range(3)]
    pat = jnp.concatenate(taps, axis=-1)                       # (N,H1,W1,9*Cin)
    pat = jnp.concatenate(
        [pat, jnp.ones(pat.shape[:-1] + (1,), pat.dtype)], axis=-1)
    k = pat.shape[-1]
    pat = pat.reshape(n, hb, 2, wb, 2, k).transpose(0, 2, 4, 1, 3, 5)
    slab = jnp.zeros((n, 2, 2, hb + 2, wb + 2, k), pat.dtype)
    slab = slab.at[:, :, :, 1:hb + 1, 1:wb + 1, :].set(pat)
    slab = slab.reshape(n, 4, (hb + 2) * (wb + 2), k)
    guard = jnp.zeros((n, 4, wb + 3, k), pat.dtype)
    a1 = jnp.concatenate([guard, slab], axis=2)
    a1 = a1.reshape(n, 4 * (wb + 3 + (hb + 2) * (wb + 2)), k)
    if k_to > k:
        a1 = jnp.pad(a1, ((0, 0), (0, 0), (0, k_to - k)))
    return a1.astype(jnp.bfloat16)


def _interior_mask(hb, wb):
    m = jnp.zeros((hb + 2, wb + 2), jnp.float32)
    m = m.at[1:hb + 1, 1:wb + 1].set(1.0)
    return m.reshape((hb + 2) * (wb + 2), 1)


def _const_spec(a):
    nd = a.ndim
    return pl.BlockSpec(a.shape, lambda i: (0,) * nd)


# ----------------------------------------------------------------------------
# Model (encoder -> decoder -> header)
# ----------------------------------------------------------------------------
class PallasModel:
    def __init__(self, key, in_channels=3, enc_channels=(8, 16),
                 dec_channels=16, num_classes=5):
        c1, c2 = enc_channels
        keys = jax.random.split(key, 6)
        w_e1, b_e1 = _init_conv(keys[0], c1, in_channels, 3, 3)
        w_e2, b_e2 = _init_conv(keys[1], c2, c1, 3, 3)
        w_l1, b_l1 = _init_conv(keys[2], dec_channels, c1, 1, 1)
        w_l2, b_l2 = _init_conv(keys[3], dec_channels, c2, 1, 1)
        w_d, b_d = _init_conv(keys[4], dec_channels, dec_channels, 3, 3)
        w_h, b_h = _init_conv(keys[5], num_classes, dec_channels, 1, 1)

        self.in_channels = in_channels
        self.num_classes = num_classes
        self.k1p = _round_up(9 * in_channels + 1, 8)       # conv-1 K (+bias col)
        self.W1p = _pack_conv(w_e1, bias=b_e1, rows_to=self.k1p)
        self.W2p = _pack_conv(w_e2)                        # (72, 16)
        self.Wl1 = _pack_conv(w_l1)                        # (8, 16)
        self.Wl2 = _pack_conv(w_l2)                        # (16, 16)
        self.Wd = _pack_conv(w_d)                          # (144, 16)
        self.Wh = _pack_conv(w_h)                          # (16, num_classes)
        self.b2 = b_e2.reshape(1, -1)
        self.bl = (b_l1 + b_l2).reshape(1, -1)             # fused FPN-add bias
        self.bd = b_d.reshape(1, -1)
        self.bh = b_h.reshape(1, -1)
        # raw f32 weights kept only for the in-script reference check
        self.raw_params = (w_e1, b_e1, w_e2, b_e2, w_l1, b_l1, w_l2, b_l2,
                           w_d, b_d, w_h, b_h)

    def __call__(self, x_nchw, target=None):
        # TODO(synk): training-mode loss branch (target dict) not implemented;
        # the forward returns inference logits like the eval path.
        n, c, h, w = x_nchw.shape
        assert c == self.in_channels and h % 4 == 0 and w % 4 == 0
        hb, wb = h // 4, w // 4
        L = (hb + 2) * (wb + 2)
        rows1 = 4 * (wb + 3 + L)
        nc = self.num_classes

        # Wrapper-side glue (tiny, read-once): NCHW->NHWC + phase-ordered
        # patch matrix for the first conv + constant interior mask.
        x = jnp.transpose(x_nchw, (0, 2, 3, 1))
        a1 = _build_phase_patches(x, hb, wb, self.k1p)
        mask = _interior_mask(hb, wb)

        kernel = functools.partial(_fused_forward_kernel, hb=hb, wb=wb)
        # TODO(synk): for large images, tile the phase slabs spatially instead
        # of processing a whole image per grid step (VMEM per image here is a
        # few tens of bytes per input pixel; fine for moderate resolutions).
        out = pl.pallas_call(
            kernel,
            out_shape=jax.ShapeDtypeStruct((n, 4, L, nc), jnp.float32),
            grid=(n,),
            in_specs=[
                pl.BlockSpec((1, rows1, self.k1p), lambda i: (i, 0, 0)),
                _const_spec(mask),
                _const_spec(self.W1p), _const_spec(self.W2p),
                _const_spec(self.b2),
                _const_spec(self.Wl1), _const_spec(self.Wl2),
                _const_spec(self.bl),
                _const_spec(self.Wd), _const_spec(self.bd),
                _const_spec(self.Wh), _const_spec(self.bh),
            ],
            out_specs=pl.BlockSpec((1, 4, L, nc), lambda i: (i, 0, 0, 0)),
            compiler_params=pltpu.CompilerParams(
                dimension_semantics=("parallel",)),   # batch across v7x cores
        )(a1, mask, self.W1p, self.W2p, self.b2, self.Wl1, self.Wl2, self.bl,
          self.Wd, self.bd, self.Wh, self.bh)

        # De-interleave the four output phases back to (N, H/2, W/2, nc) and
        # return NCHW logits (single tiny layout op on the final tensor).
        out = out.reshape(n, 2, 2, hb + 2, wb + 2, nc)
        out = out[:, :, :, 1:hb + 1, 1:wb + 1, :]
        out = out.transpose(0, 3, 1, 4, 2, 5).reshape(n, 2 * hb, 2 * wb, nc)
        return jnp.transpose(out, (0, 3, 1, 2))


# ----------------------------------------------------------------------------
# Pure-JAX reference (f32, lax.conv) of the same network, for validation
# ----------------------------------------------------------------------------
def _ref_forward(x_nchw, raw):
    (w_e1, b_e1, w_e2, b_e2, w_l1, b_l1, w_l2, b_l2,
     w_d, b_d, w_h, b_h) = raw

    def conv(x, w, b, stride, pad):
        y = jax.lax.conv_general_dilated(
            x, jnp.transpose(w, (2, 3, 1, 0)),
            window_strides=(stride, stride),
            padding=((pad, pad), (pad, pad)),
            dimension_numbers=("NHWC", "HWIO", "NHWC"))
        return y + b

    x = jnp.transpose(x_nchw, (0, 2, 3, 1))
    f1 = jax.nn.relu(conv(x, w_e1, b_e1, 2, 1))
    f2 = jax.nn.relu(conv(f1, w_e2, b_e2, 2, 1))
    lat1 = conv(f1, w_l1, b_l1, 1, 0)
    lat2 = conv(f2, w_l2, b_l2, 1, 0)
    m = lat1 + jnp.repeat(jnp.repeat(lat2, 2, axis=1), 2, axis=2)
    d = jax.nn.relu(conv(m, w_d, b_d, 1, 1))
    logits = conv(d, w_h, b_h, 1, 0)
    return jnp.transpose(logits, (0, 3, 1, 2))


if __name__ == "__main__":
    key = jax.random.PRNGKey(0)
    k_param, k_data = jax.random.split(key)

    model = PallasModel(k_param, in_channels=3, enc_channels=(8, 16),
                        dec_channels=16, num_classes=5)

    x = jax.random.normal(k_data, (2, 3, 16, 16), jnp.float32)   # NCHW input

    forward = jax.jit(lambda inp: model(inp))
    out = jax.block_until_ready(forward(x))

    assert out.shape == (2, 5, 8, 8), out.shape
    assert bool(jnp.all(jnp.isfinite(out)))

    # numerical check against the pure-JAX f32 reference (kernel uses bf16
    # MXU operands with f32 accumulation, so a loose tolerance is expected)
    ref = jax.block_until_ready(_ref_forward(x, model.raw_params))
    max_err = float(jnp.max(jnp.abs(out - ref)))
    assert max_err < 0.1, f"max |pallas - reference| = {max_err}"

    print("KERNEL_OK")
</pallas_src>

<mosaic_0001>
module attributes {stable_mosaic.version = 11 : i64} {
  func.func @_fused_forward_kernel(%arg0: i32, %arg1: memref<1x172x32xbf16, #tpu.memory_space<vmem>>, %arg2: memref<36x1xf32, #tpu.memory_space<vmem>>, %arg3: memref<32x8xbf16, #tpu.memory_space<vmem>>, %arg4: memref<72x16xbf16, #tpu.memory_space<vmem>>, %arg5: memref<1x16xf32, #tpu.memory_space<vmem>>, %arg6: memref<8x16xbf16, #tpu.memory_space<vmem>>, %arg7: memref<16x16xbf16, #tpu.memory_space<vmem>>, %arg8: memref<1x16xf32, #tpu.memory_space<vmem>>, %arg9: memref<144x16xbf16, #tpu.memory_space<vmem>>, %arg10: memref<1x16xf32, #tpu.memory_space<vmem>>, %arg11: memref<16x5xbf16, #tpu.memory_space<vmem>>, %arg12: memref<1x5xf32, #tpu.memory_space<vmem>>, %arg13: memref<1x4x36x5xf32, #tpu.memory_space<vmem>>) attributes {dimension_semantics = [#tpu.dimension_semantics<parallel>], iteration_bounds = array<i64: 2>, scalar_prefetch = 0 : i64, scratch_operands = 0 : i64, tpu.core_type = #tpu.core_type<tc>, window_params = [{transform_indices = @transform_0, window_bounds = array<i64: 1, 172, 32>}, {pipeline_mode = #tpu.pipeline_mode<synchronous>, transform_indices = @transform_1, window_bounds = array<i64: 36, 1>}, {pipeline_mode = #tpu.pipeline_mode<synchronous>, transform_indices = @transform_2, window_bounds = array<i64: 32, 8>}, {pipeline_mode = #tpu.pipeline_mode<synchronous>, transform_indices = @transform_3, window_bounds = array<i64: 72, 16>}, {pipeline_mode = #tpu.pipeline_mode<synchronous>, transform_indices = @transform_4, window_bounds = array<i64: 1, 16>}, {pipeline_mode = #tpu.pipeline_mode<synchronous>, transform_indices = @transform_5, window_bounds = array<i64: 8, 16>}, {pipeline_mode = #tpu.pipeline_mode<synchronous>, transform_indices = @transform_6, window_bounds = array<i64: 16, 16>}, {pipeline_mode = #tpu.pipeline_mode<synchronous>, transform_indices = @transform_7, window_bounds = array<i64: 1, 16>}, {pipeline_mode = #tpu.pipeline_mode<synchronous>, transform_indices = @transform_8, window_bounds = array<i64: 144, 16>}, {pipeline_mode = #tpu.pipeline_mode<synchronous>, transform_indices = @transform_9, window_bounds = array<i64: 1, 16>}, {pipeline_mode = #tpu.pipeline_mode<synchronous>, transform_indices = @transform_10, window_bounds = array<i64: 16, 5>}, {pipeline_mode = #tpu.pipeline_mode<synchronous>, transform_indices = @transform_11, window_bounds = array<i64: 1, 5>}, {transform_indices = @transform_12, window_bounds = array<i64: 1, 4, 36, 5>}]} {
    %c0 = arith.constant 0 : index
    %c0_0 = arith.constant 0 : index
    %c0_1 = arith.constant 0 : index
    %0 = vector.load %arg1[%c0, %c0_0, %c0_1] : memref<1x172x32xbf16, #tpu.memory_space<vmem>>, vector<1x172x32xbf16>
    %1 = vector.shape_cast %0 : vector<1x172x32xbf16> to vector<172x32xbf16>
    %c0_2 = arith.constant 0 : index
    %c0_3 = arith.constant 0 : index
    %2 = vector.load %arg3[%c0_2, %c0_3] : memref<32x8xbf16, #tpu.memory_space<vmem>>, vector<32x8xbf16>
    %cst = arith.constant dense<0.000000e+00> : vector<172x8xf32>
    %3 = tpu.matmul %1, %2, %cst {dimension_numbers = #tpu.dot_dimension_numbers<[1], [0], [0], [1], [0, 0, 1, 1], [], []>} : vector<172x32xbf16>, vector<32x8xbf16>, vector<172x8xf32> -> vector<172x8xf32>
    %cst_4 = arith.constant 0.000000e+00 : f32
    %4 = vector.broadcast %cst_4 : f32 to vector<172x8xf32>
    %5 = arith.maximumf %3, %4 : vector<172x8xf32>
    %6 = arith.truncf %5 : vector<172x8xf32> to vector<172x8xbf16>
    %7 = vector.extract_strided_slice %6 {offsets = [129, 0], sizes = [36, 8], strides = [1, 1]} : vector<172x8xbf16> to vector<36x8xbf16>
    %8 = vector.extract_strided_slice %6 {offsets = [87, 0], sizes = [36, 8], strides = [1, 1]} : vector<172x8xbf16> to vector<36x8xbf16>
    %9 = vector.extract_strided_slice %6 {offsets = [130, 0], sizes = [36, 8], strides = [1, 1]} : vector<172x8xbf16> to vector<36x8xbf16>
    %10 = vector.extract_strided_slice %6 {offsets = [49, 0], sizes = [36, 8], strides = [1, 1]} : vector<172x8xbf16> to vector<36x8xbf16>
    %11 = vector.extract_strided_slice %6 {offsets = [7, 0], sizes = [36, 8], strides = [1, 1]} : vector<172x8xbf16> to vector<36x8xbf16>
    %12 = vector.extract_strided_slice %6 {offsets = [50, 0], sizes = [36, 8], strides = [1, 1]} : vector<172x8xbf16> to vector<36x8xbf16>
    %13 = vector.extract_strided_slice %6 {offsets = [135, 0], sizes = [36, 8], strides = [1, 1]} : vector<172x8xbf16> to vector<36x8xbf16>
    %14 = vector.extract_strided_slice %6 {offsets = [93, 0], sizes = [36, 8], strides = [1, 1]} : vector<172x8xbf16> to vector<36x8xbf16>
    %15 = vector.extract_strided_slice %6 {offsets = [136, 0], sizes = [36, 8], strides = [1, 1]} : vector<172x8xbf16> to vector<36x8xbf16>
    %16 = tpu.concatenate %7, %8, %9, %10, %11, %12, %13, %14, %15 in 1 : vector<36x8xbf16>, vector<36x8xbf16>, vector<36x8xbf16>, vector<36x8xbf16>, vector<36x8xbf16>, vector<36x8xbf16>, vector<36x8xbf16>, vector<36x8xbf16>, vector<36x8xbf16> -> vector<36x72xbf16>
    %c0_5 = arith.constant 0 : index
    %c0_6 = arith.constant 0 : index
    %17 = vector.load %arg4[%c0_5, %c0_6] : memref<72x16xbf16, #tpu.memory_space<vmem>>, vector<72x16xbf16>
    %cst_7 = arith.constant dense<0.000000e+00> : vector<36x16xf32>
    %18 = tpu.matmul %16, %17, %cst_7 {dimension_numbers = #tpu.dot_dimension_numbers<[1], [0], [0], [1], [0, 0, 1, 1], [], []>} : vector<36x72xbf16>, vector<72x16xbf16>, vector<36x16xf32> -> vector<36x16xf32>
    %c0_8 = arith.constant 0 : index
    %c0_9 = arith.constant 0 : index
    %19 = vector.load %arg5[%c0_8, %c0_9] : memref<1x16xf32, #tpu.memory_space<vmem>>, vector<1x16xf32>
    %20 = vector.broadcast %19 : vector<1x16xf32> to vector<36x16xf32>
    %21 = arith.addf %18, %20 : vector<36x16xf32>
    %cst_10 = arith.constant 0.000000e+00 : f32
    %22 = vector.broadcast %cst_10 : f32 to vector<36x16xf32>
    %23 = arith.maximumf %21, %22 : vector<36x16xf32>
    %24 = arith.truncf %23 : vector<36x16xf32> to vector<36x16xbf16>
    %c0_11 = arith.constant 0 : index
    %c0_12 = arith.constant 0 : index
    %25 = vector.load %arg7[%c0_11, %c0_12] : memref<16x16xbf16, #tpu.memory_space<vmem>>, vector<16x16xbf16>
    %cst_13 = arith.constant dense<0.000000e+00> : vector<36x16xf32>
    %26 = tpu.matmul %24, %25, %cst_13 {dimension_numbers = #tpu.dot_dimension_numbers<[1], [0], [0], [1], [0, 0, 1, 1], [], []>} : vector<36x16xbf16>, vector<16x16xbf16>, vector<36x16xf32> -> vector<36x16xf32>
    %c0_14 = arith.constant 0 : index
    %c0_15 = arith.constant 0 : index
    %27 = vector.load %arg6[%c0_14, %c0_15] : memref<8x16xbf16, #tpu.memory_space<vmem>>, vector<8x16xbf16>
    %cst_16 = arith.constant dense<0.000000e+00> : vector<172x16xf32>
    %28 = tpu.matmul %6, %27, %cst_16 {dimension_numbers = #tpu.dot_dimension_numbers<[1], [0], [0], [1], [0, 0, 1, 1], [], []>} : vector<172x8xbf16>, vector<8x16xbf16>, vector<172x16xf32> -> vector<172x16xf32>
    %c0_17 = arith.constant 0 : index
    %c0_18 = arith.constant 0 : index
    %29 = vector.load %arg2[%c0_17, %c0_18] : memref<36x1xf32, #tpu.memory_space<vmem>>, vector<36x1xf32>
    %cst_19 = arith.constant 0.000000e+00 : bf16
    %30 = vector.broadcast %cst_19 : bf16 to vector<7x16xbf16>
    %31 = vector.extract_strided_slice %28 {offsets = [7, 0], sizes = [36, 16], strides = [1, 1]} : vector<172x16xf32> to vector<36x16xf32>
    %32 = arith.addf %31, %26 : vector<36x16xf32>
    %c0_20 = arith.constant 0 : index
    %c0_21 = arith.constant 0 : index
    %33 = vector.load %arg8[%c0_20, %c0_21] : memref<1x16xf32, #tpu.memory_space<vmem>>, vector<1x16xf32>
    %34 = vector.broadcast %33 : vector<1x16xf32> to vector<36x16xf32>
    %35 = arith.addf %32, %34 : vector<36x16xf32>
    %36 = vector.broadcast %29 : vector<36x1xf32> to vector<36x16xf32>
    %37 = arith.mulf %35, %36 : vector<36x16xf32>
    %38 = arith.truncf %37 : vector<36x16xf32> to vector<36x16xbf16>
    %39 = tpu.concatenate %30, %38, %30 in 0 : vector<7x16xbf16>, vector<36x16xbf16>, vector<7x16xbf16> -> vector<50x16xbf16>
    %40 = vector.extract_strided_slice %28 {offsets = [50, 0], sizes = [36, 16], strides = [1, 1]} : vector<172x16xf32> to vector<36x16xf32>
    %41 = arith.addf %40, %26 : vector<36x16xf32>
    %c0_22 = arith.constant 0 : index
    %c0_23 = arith.constant 0 : index
    %42 = vector.load %arg8[%c0_22, %c0_23] : memref<1x16xf32, #tpu.memory_space<vmem>>, vector<1x16xf32>
    %43 = vector.broadcast %42 : vector<1x16xf32> to vector<36x16xf32>
    %44 = arith.addf %41, %43 : vector<36x16xf32>
    %45 = vector.broadcast %29 : vector<36x1xf32> to vector<36x16xf32>
    %46 = arith.mulf %44, %45 : vector<36x16xf32>
    %47 = arith.truncf %46 : vector<36x16xf32> to vector<36x16xbf16>
    %48 = tpu.concatenate %30, %47, %30 in 0 : vector<7x16xbf16>, vector<36x16xbf16>, vector<7x16xbf16> -> vector<50x16xbf16>
    %49 = vector.extract_strided_slice %28 {offsets = [93, 0], sizes = [36, 16], strides = [1, 1]} : vector<172x16xf32> to vector<36x16xf32>
    %50 = arith.addf %49, %26 : vector<36x16xf32>
    %c0_24 = arith.constant 0 : index
    %c0_25 = arith.constant 0 : index
    %51 = vector.load %arg8[%c0_24, %c0_25] : memref<1x16xf32, #tpu.memory_space<vmem>>, vector<1x16xf32>
    %52 = vector.broadcast %51 : vector<1x16xf32> to vector<36x16xf32>
    %53 = arith.addf %50, %52 : vector<36x16xf32>
    %54 = vector.broadcast %29 : vector<36x1xf32> to vector<36x16xf32>
    %55 = arith.mulf %53, %54 : vector<36x16xf32>
    %56 = arith.truncf %55 : vector<36x16xf32> to vector<36x16xbf16>
    %57 = tpu.concatenate %30, %56, %30 in 0 : vector<7x16xbf16>, vector<36x16xbf16>, vector<7x16xbf16> -> vector<50x16xbf16>
    %58 = vector.extract_strided_slice %28 {offsets = [136, 0], sizes = [36, 16], strides = [1, 1]} : vector<172x16xf32> to vector<36x16xf32>
    %59 = arith.addf %58, %26 : vector<36x16xf32>
    %c0_26 = arith.constant 0 : index
    %c0_27 = arith.constant 0 : index
    %60 = vector.load %arg8[%c0_26, %c0_27] : memref<1x16xf32, #tpu.memory_space<vmem>>, vector<1x16xf32>
    %61 = vector.broadcast %60 : vector<1x16xf32> to vector<36x16xf32>
    %62 = arith.addf %59, %61 : vector<36x16xf32>
    %63 = vector.broadcast %29 : vector<36x1xf32> to vector<36x16xf32>
    %64 = arith.mulf %62, %63 : vector<36x16xf32>
    %65 = arith.truncf %64 : vector<36x16xf32> to vector<36x16xbf16>
    %66 = tpu.concatenate %30, %65, %30 in 0 : vector<7x16xbf16>, vector<36x16xbf16>, vector<7x16xbf16> -> vector<50x16xbf16>
    %67 = vector.extract_strided_slice %66 {offsets = [0, 0], sizes = [36, 16], strides = [1, 1]} : vector<50x16xbf16> to vector<36x16xbf16>
    %68 = vector.extract_strided_slice %57 {offsets = [1, 0], sizes = [36, 16], strides = [1, 1]} : vector<50x16xbf16> to vector<36x16xbf16>
    %69 = vector.extract_strided_slice %66 {offsets = [1, 0], sizes = [36, 16], strides = [1, 1]} : vector<50x16xbf16> to vector<36x16xbf16>
    %70 = vector.extract_strided_slice %48 {offsets = [6, 0], sizes = [36, 16], strides = [1, 1]} : vector<50x16xbf16> to vector<36x16xbf16>
    %71 = vector.extract_strided_slice %39 {offsets = [7, 0], sizes = [36, 16], strides = [1, 1]} : vector<50x16xbf16> to vector<36x16xbf16>
    %72 = vector.extract_strided_slice %48 {offsets = [7, 0], sizes = [36, 16], strides = [1, 1]} : vector<50x16xbf16> to vector<36x16xbf16>
    %73 = vector.extract_strided_slice %66 {offsets = [6, 0], sizes = [36, 16], strides = [1, 1]} : vector<50x16xbf16> to vector<36x16xbf16>
    %74 = vector.extract_strided_slice %57 {offsets = [7, 0], sizes = [36, 16], strides = [1, 1]} : vector<50x16xbf16> to vector<36x16xbf16>
    %75 = vector.extract_strided_slice %66 {offsets = [7, 0], sizes = [36, 16], strides = [1, 1]} : vector<50x16xbf16> to vector<36x16xbf16>
    %76 = tpu.concatenate %67, %68, %69, %70, %71, %72, %73, %74, %75 in 1 : vector<36x16xbf16>, vector<36x16xbf16>, vector<36x16xbf16>, vector<36x16xbf16>, vector<36x16xbf16>, vector<36x16xbf16>, vector<36x16xbf16>, vector<36x16xbf16>, vector<36x16xbf16> -> vector<36x144xbf16>
    %c0_28 = arith.constant 0 : index
    %c0_29 = arith.constant 0 : index
    %77 = vector.load %arg9[%c0_28, %c0_29] : memref<144x16xbf16, #tpu.memory_space<vmem>>, vector<144x16xbf16>
    %cst_30 = arith.constant dense<0.000000e+00> : vector<36x16xf32>
    %78 = tpu.matmul %76, %77, %cst_30 {dimension_numbers = #tpu.dot_dimension_numbers<[1], [0], [0], [1], [0, 0, 1, 1], [], []>} : vector<36x144xbf16>, vector<144x16xbf16>, vector<36x16xf32> -> vector<36x16xf32>
    %c0_31 = arith.constant 0 : index
    %c0_32 = arith.constant 0 : index
    %79 = vector.load %arg10[%c0_31, %c0_32] : memref<1x16xf32, #tpu.memory_space<vmem>>, vector<1x16xf32>
    %80 = vector.broadcast %79 : vector<1x16xf32> to vector<36x16xf32>
    %81 = arith.addf %78, %80 : vector<36x16xf32>
    %cst_33 = arith.constant 0.000000e+00 : f32
    %82 = vector.broadcast %cst_33 : f32 to vector<36x16xf32>
    %83 = arith.maximumf %81, %82 : vector<36x16xf32>
    %84 = arith.truncf %83 : vector<36x16xf32> to vector<36x16xbf16>
    %c0_34 = arith.constant 0 : index
    %c0_35 = arith.constant 0 : index
    %85 = vector.load %arg11[%c0_34, %c0_35] : memref<16x5xbf16, #tpu.memory_space<vmem>>, vector<16x5xbf16>
    %cst_36 = arith.constant dense<0.000000e+00> : vector<36x5xf32>
    %86 = tpu.matmul %84, %85, %cst_36 {dimension_numbers = #tpu.dot_dimension_numbers<[1], [0], [0], [1], [0, 0, 1, 1], [], []>} : vector<36x16xbf16>, vector<16x5xbf16>, vector<36x5xf32> -> vector<36x5xf32>
    %c0_37 = arith.constant 0 : index
    %c0_38 = arith.constant 0 : index
    %87 = vector.load %arg12[%c0_37, %c0_38] : memref<1x5xf32, #tpu.memory_space<vmem>>, vector<1x5xf32>
    %88 = vector.broadcast %87 : vector<1x5xf32> to vector<36x5xf32>
    %89 = arith.addf %86, %88 : vector<36x5xf32>
    %c0_39 = arith.constant 0 : index
    %c0_40 = arith.constant 0 : index
    %c0_41 = arith.constant 0 : index
    %c0_42 = arith.constant 0 : index
    %90 = vector.load %arg13[%c0_39, %c0_40, %c0_41, %c0_42] : memref<1x4x36x5xf32, #tpu.memory_space<vmem>>, vector<1x1x36x5xf32>
    %91 = vector.shape_cast %90 : vector<1x1x36x5xf32> to vector<36x5xf32>
    %92 = vector.shape_cast %89 : vector<36x5xf32> to vector<1x1x36x5xf32>
    tpu.vector_store %arg13[%c0_39, %c0_40, %c0_41, %c0_42], %92 {strides = array<i32>} : memref<1x4x36x5xf32, #tpu.memory_space<vmem>>, vector<1x1x36x5xf32>,
    %93 = vector.extract_strided_slice %57 {offsets = [1, 0], sizes = [36, 16], strides = [1, 1]} : vector<50x16xbf16> to vector<36x16xbf16>
    %94 = vector.extract_strided_slice %66 {offsets = [1, 0], sizes = [36, 16], strides = [1, 1]} : vector<50x16xbf16> to vector<36x16xbf16>
    %95 = vector.extract_strided_slice %57 {offsets = [2, 0], sizes = [36, 16], strides = [1, 1]} : vector<50x16xbf16> to vector<36x16xbf16>
    %96 = vector.extract_strided_slice %39 {offsets = [7, 0], sizes = [36, 16], strides = [1, 1]} : vector<50x16xbf16> to vector<36x16xbf16>
    %97 = vector.extract_strided_slice %48 {offsets = [7, 0], sizes = [36, 16], strides = [1, 1]} : vector<50x16xbf16> to vector<36x16xbf16>
    %98 = vector.extract_strided_slice %39 {offsets = [8, 0], sizes = [36, 16], strides = [1, 1]} : vector<50x16xbf16> to vector<36x16xbf16>
    %99 = vector.extract_strided_slice %57 {offsets = [7, 0], sizes = [36, 16], strides = [1, 1]} : vector<50x16xbf16> to vector<36x16xbf16>
    %100 = vector.extract_strided_slice %66 {offsets = [7, 0], sizes = [36, 16], strides = [1, 1]} : vector<50x16xbf16> to vector<36x16xbf16>
    %101 = vector.extract_strided_slice %57 {offsets = [8, 0], sizes = [36, 16], strides = [1, 1]} : vector<50x16xbf16> to vector<36x16xbf16>
    %102 = tpu.concatenate %93, %94, %95, %96, %97, %98, %99, %100, %101 in 1 : vector<36x16xbf16>, vector<36x16xbf16>, vector<36x16xbf16>, vector<36x16xbf16>, vector<36x16xbf16>, vector<36x16xbf16>, vector<36x16xbf16>, vector<36x16xbf16>, vector<36x16xbf16> -> vector<36x144xbf16>
    %c0_43 = arith.constant 0 : index
    %c0_44 = arith.constant 0 : index
    %103 = vector.load %arg9[%c0_43, %c0_44] : memref<144x16xbf16, #tpu.memory_space<vmem>>, vector<144x16xbf16>
    %cst_45 = arith.constant dense<0.000000e+00> : vector<36x16xf32>
    %104 = tpu.matmul %102, %103, %cst_45 {dimension_numbers = #tpu.dot_dimension_numbers<[1], [0], [0], [1], [0, 0, 1, 1], [], []>} : vector<36x144xbf16>, vector<144x16xbf16>, vector<36x16xf32> -> vector<36x16xf32>
    %c0_46 = arith.constant 0 : index
    %c0_47 = arith.constant 0 : index
    %105 = vector.load %arg10[%c0_46, %c0_47] : memref<1x16xf32, #tpu.memory_space<vmem>>, vector<1x16xf32>
    %106 = vector.broadcast %105 : vector<1x16xf32> to vector<36x16xf32>
    %107 = arith.addf %104, %106 : vector<36x16xf32>
    %cst_48 = arith.constant 0.000000e+00 : f32
    %108 = vector.broadcast %cst_48 : f32 to vector<36x16xf32>
    %109 = arith.maximumf %107, %108 : vector<36x16xf32>
    %110 = arith.truncf %109 : vector<36x16xf32> to vector<36x16xbf16>
    %c0_49 = arith.constant 0 : index
    %c0_50 = arith.constant 0 : index
    %111 = vector.load %arg11[%c0_49, %c0_50] : memref<16x5xbf16, #tpu.memory_space<vmem>>, vector<16x5xbf16>
    %cst_51 = arith.constant dense<0.000000e+00> : vector<36x5xf32>
    %112 = tpu.matmul %110, %111, %cst_51 {dimension_numbers = #tpu.dot_dimension_numbers<[1], [0], [0], [1], [0, 0, 1, 1], [], []>} : vector<36x16xbf16>, vector<16x5xbf16>, vector<36x5xf32> -> vector<36x5xf32>
    %c0_52 = arith.constant 0 : index
    %c0_53 = arith.constant 0 : index
    %113 = vector.load %arg12[%c0_52, %c0_53] : memref<1x5xf32, #tpu.memory_space<vmem>>, vector<1x5xf32>
    %114 = vector.broadcast %113 : vector<1x5xf32> to vector<36x5xf32>
    %115 = arith.addf %112, %114 : vector<36x5xf32>
    %c0_54 = arith.constant 0 : index
    %c1 = arith.constant 1 : index
    %c0_55 = arith.constant 0 : index
    %c0_56 = arith.constant 0 : index
    %116 = vector.load %arg13[%c0_54, %c1, %c0_55, %c0_56] : memref<1x4x36x5xf32, #tpu.memory_space<vmem>>, vector<1x1x36x5xf32>
    %117 = vector.shape_cast %116 : vector<1x1x36x5xf32> to vector<36x5xf32>
    %118 = vector.shape_cast %115 : vector<36x5xf32> to vector<1x1x36x5xf32>
    tpu.vector_store %arg13[%c0_54, %c1, %c0_55, %c0_56], %118 {strides = array<i32>} : memref<1x4x36x5xf32, #tpu.memory_space<vmem>>, vector<1x1x36x5xf32>,
    %119 = vector.extract_strided_slice %48 {offsets = [6, 0], sizes = [36, 16], strides = [1, 1]} : vector<50x16xbf16> to vector<36x16xbf16>
    %120 = vector.extract_strided_slice %39 {offsets = [7, 0], sizes = [36, 16], strides = [1, 1]} : vector<50x16xbf16> to vector<36x16xbf16>
    %121 = vector.extract_strided_slice %48 {offsets = [7, 0], sizes = [36, 16], strides = [1, 1]} : vector<50x16xbf16> to vector<36x16xbf16>
    %122 = vector.extract_strided_slice %66 {offsets = [6, 0], sizes = [36, 16], strides = [1, 1]} : vector<50x16xbf16> to vector<36x16xbf16>
    %123 = vector.extract_strided_slice %57 {offsets = [7, 0], sizes = [36, 16], strides = [1, 1]} : vector<50x16xbf16> to vector<36x16xbf16>
    %124 = vector.extract_strided_slice %66 {offsets = [7, 0], sizes = [36, 16], strides = [1, 1]} : vector<50x16xbf16> to vector<36x16xbf16>
    %125 = vector.extract_strided_slice %48 {offsets = [12, 0], sizes = [36, 16], strides = [1, 1]} : vector<50x16xbf16> to vector<36x16xbf16>
    %126 = vector.extract_strided_slice %39 {offsets = [13, 0], sizes = [36, 16], strides = [1, 1]} : vector<50x16xbf16> to vector<36x16xbf16>
    %127 = vector.extract_strided_slice %48 {offsets = [13, 0], sizes = [36, 16], strides = [1, 1]} : vector<50x16xbf16> to vector<36x16xbf16>
    %128 = tpu.concatenate %119, %120, %121, %122, %123, %124, %125, %126, %127 in 1 : vector<36x16xbf16>, vector<36x16xbf16>, vector<36x16xbf16>, vector<36x16xbf16>, vector<36x16xbf16>, vector<36x16xbf16>, vector<36x16xbf16>, vector<36x16xbf16>, vector<36x16xbf16> -> vector<36x144xbf16>
    %c0_57 = arith.constant 0 : index
    %c0_58 = arith.constant 0 : index
    %129 = vector.load %arg9[%c0_57, %c0_58] : memref<144x16xbf16, #tpu.memory_space<vmem>>, vector<144x16xbf16>
    %cst_59 = arith.constant dense<0.000000e+00> : vector<36x16xf32>
    %130 = tpu.matmul %128, %129, %cst_59 {dimension_numbers = #tpu.dot_dimension_numbers<[1], [0], [0], [1], [0, 0, 1, 1], [], []>} : vector<36x144xbf16>, vector<144x16xbf16>, vector<36x16xf32> -> vector<36x16xf32>
    %c0_60 = arith.constant 0 : index
    %c0_61 = arith.constant 0 : index
    %131 = vector.load %arg10[%c0_60, %c0_61] : memref<1x16xf32, #tpu.memory_space<vmem>>, vector<1x16xf32>
    %132 = vector.broadcast %131 : vector<1x16xf32> to vector<36x16xf32>
    %133 = arith.addf %130, %132 : vector<36x16xf32>
    %cst_62 = arith.constant 0.000000e+00 : f32
    %134 = vector.broadcast %cst_62 : f32 to vector<36x16xf32>
    %135 = arith.maximumf %133, %134 : vector<36x16xf32>
    %136 = arith.truncf %135 : vector<36x16xf32> to vector<36x16xbf16>
    %c0_63 = arith.constant 0 : index
    %c0_64 = arith.constant 0 : index
    %137 = vector.load %arg11[%c0_63, %c0_64] : memref<16x5xbf16, #tpu.memory_space<vmem>>, vector<16x5xbf16>
    %cst_65 = arith.constant dense<0.000000e+00> : vector<36x5xf32>
    %138 = tpu.matmul %136, %137, %cst_65 {dimension_numbers = #tpu.dot_dimension_numbers<[1], [0], [0], [1], [0, 0, 1, 1], [], []>} : vector<36x16xbf16>, vector<16x5xbf16>, vector<36x5xf32> -> vector<36x5xf32>
    %c0_66 = arith.constant 0 : index
    %c0_67 = arith.constant 0 : index
    %139 = vector.load %arg12[%c0_66, %c0_67] : memref<1x5xf32, #tpu.memory_space<vmem>>, vector<1x5xf32>
    %140 = vector.broadcast %139 : vector<1x5xf32> to vector<36x5xf32>
    %141 = arith.addf %138, %140 : vector<36x5xf32>
    %c0_68 = arith.constant 0 : index
    %c2 = arith.constant 2 : index
    %c0_69 = arith.constant 0 : index
    %c0_70 = arith.constant 0 : index
    %142 = vector.load %arg13[%c0_68, %c2, %c0_69, %c0_70] : memref<1x4x36x5xf32, #tpu.memory_space<vmem>>, vector<1x1x36x5xf32>
    %143 = vector.shape_cast %142 : vector<1x1x36x5xf32> to vector<36x5xf32>
    %144 = vector.shape_cast %141 : vector<36x5xf32> to vector<1x1x36x5xf32>
    tpu.vector_store %arg13[%c0_68, %c2, %c0_69, %c0_70], %144 {strides = array<i32>} : memref<1x4x36x5xf32, #tpu.memory_space<vmem>>, vector<1x1x36x5xf32>,
    %145 = vector.extract_strided_slice %39 {offsets = [7, 0], sizes = [36, 16], strides = [1, 1]} : vector<50x16xbf16> to vector<36x16xbf16>
    %146 = vector.extract_strided_slice %48 {offsets = [7, 0], sizes = [36, 16], strides = [1, 1]} : vector<50x16xbf16> to vector<36x16xbf16>
    %147 = vector.extract_strided_slice %39 {offsets = [8, 0], sizes = [36, 16], strides = [1, 1]} : vector<50x16xbf16> to vector<36x16xbf16>
    %148 = vector.extract_strided_slice %57 {offsets = [7, 0], sizes = [36, 16], strides = [1, 1]} : vector<50x16xbf16> to vector<36x16xbf16>
    %149 = vector.extract_strided_slice %66 {offsets = [7, 0], sizes = [36, 16], strides = [1, 1]} : vector<50x16xbf16> to vector<36x16xbf16>
    %150 = vector.extract_strided_slice %57 {offsets = [8, 0], sizes = [36, 16], strides = [1, 1]} : vector<50x16xbf16> to vector<36x16xbf16>
    %151 = vector.extract_strided_slice %39 {offsets = [13, 0], sizes = [36, 16], strides = [1, 1]} : vector<50x16xbf16> to vector<36x16xbf16>
    %152 = vector.extract_strided_slice %48 {offsets = [13, 0], sizes = [36, 16], strides = [1, 1]} : vector<50x16xbf16> to vector<36x16xbf16>
    %153 = vector.extract_strided_slice %39 {offsets = [14, 0], sizes = [36, 16], strides = [1, 1]} : vector<50x16xbf16> to vector<36x16xbf16>
    %154 = tpu.concatenate %145, %146, %147, %148, %149, %150, %151, %152, %153 in 1 : vector<36x16xbf16>, vector<36x16xbf16>, vector<36x16xbf16>, vector<36x16xbf16>, vector<36x16xbf16>, vector<36x16xbf16>, vector<36x16xbf16>, vector<36x16xbf16>, vector<36x16xbf16> -> vector<36x144xbf16>
    %c0_71 = arith.constant 0 : index
    %c0_72 = arith.constant 0 : index
    %155 = vector.load %arg9[%c0_71, %c0_72] : memref<144x16xbf16, #tpu.memory_space<vmem>>, vector<144x16xbf16>
    %cst_73 = arith.constant dense<0.000000e+00> : vector<36x16xf32>
    %156 = tpu.matmul %154, %155, %cst_73 {dimension_numbers = #tpu.dot_dimension_numbers<[1], [0], [0], [1], [0, 0, 1, 1], [], []>} : vector<36x144xbf16>, vector<144x16xbf16>, vector<36x16xf32> -> vector<36x16xf32>
    %c0_74 = arith.constant 0 : index
    %c0_75 = arith.constant 0 : index
    %157 = vector.load %arg10[%c0_74, %c0_75] : memref<1x16xf32, #tpu.memory_space<vmem>>, vector<1x16xf32>
    %158 = vector.broadcast %157 : vector<1x16xf32> to vector<36x16xf32>
    %159 = arith.addf %156, %158 : vector<36x16xf32>
    %cst_76 = arith.constant 0.000000e+00 : f32
    %160 = vector.broadcast %cst_76 : f32 to vector<36x16xf32>
    %161 = arith.maximumf %159, %160 : vector<36x16xf32>
    %162 = arith.truncf %161 : vector<36x16xf32> to vector<36x16xbf16>
    %c0_77 = arith.constant 0 : index
    %c0_78 = arith.constant 0 : index
    %163 = vector.load %arg11[%c0_77, %c0_78] : memref<16x5xbf16, #tpu.memory_space<vmem>>, vector<16x5xbf16>
    %cst_79 = arith.constant dense<0.000000e+00> : vector<36x5xf32>
    %164 = tpu.matmul %162, %163, %cst_79 {dimension_numbers = #tpu.dot_dimension_numbers<[1], [0], [0], [1], [0, 0, 1, 1], [], []>} : vector<36x16xbf16>, vector<16x5xbf16>, vector<36x5xf32> -> vector<36x5xf32>
    %c0_80 = arith.constant 0 : index
    %c0_81 = arith.constant 0 : index
    %165 = vector.load %arg12[%c0_80, %c0_81] : memref<1x5xf32, #tpu.memory_space<vmem>>, vector<1x5xf32>
    %166 = vector.broadcast %165 : vector<1x5xf32> to vector<36x5xf32>
    %167 = arith.addf %164, %166 : vector<36x5xf32>
    %c0_82 = arith.constant 0 : index
    %c3 = arith.constant 3 : index
    %c0_83 = arith.constant 0 : index
    %c0_84 = arith.constant 0 : index
    %168 = vector.load %arg13[%c0_82, %c3, %c0_83, %c0_84] : memref<1x4x36x5xf32, #tpu.memory_space<vmem>>, vector<1x1x36x5xf32>
    %169 = vector.shape_cast %168 : vector<1x1x36x5xf32> to vector<36x5xf32>
    %170 = vector.shape_cast %167 : vector<36x5xf32> to vector<1x1x36x5xf32>
    tpu.vector_store %arg13[%c0_82, %c3, %c0_83, %c0_84], %170 {strides = array<i32>} : memref<1x4x36x5xf32, #tpu.memory_space<vmem>>, vector<1x1x36x5xf32>,
    return
  }
  func.func @transform_0(%arg0: i32) -> (i32, i32, i32) {
    %c0_i32 = arith.constant 0 : i32
    %c0_i32_0 = arith.constant 0 : i32
    %c0_i32_1 = arith.constant 0 : i32
    return %arg0, %c0_i32, %c0_i32_0 : i32, i32, i32
  }
  func.func @transform_1(%arg0: i32) -> (i32, i32) {
    %c0_i32 = arith.constant 0 : i32
    %c0_i32_0 = arith.constant 0 : i32
    %c0_i32_1 = arith.constant 0 : i32
    return %c0_i32, %c0_i32_0 : i32, i32
  }
  func.func @transform_2(%arg0: i32) -> (i32, i32) {
    %c0_i32 = arith.constant 0 : i32
    %c0_i32_0 = arith.constant 0 : i32
    %c0_i32_1 = arith.constant 0 : i32
    return %c0_i32, %c0_i32_0 : i32, i32
  }
  func.func @transform_3(%arg0: i32) -> (i32, i32) {
    %c0_i32 = arith.constant 0 : i32
    %c0_i32_0 = arith.constant 0 : i32
    %c0_i32_1 = arith.constant 0 : i32
    return %c0_i32, %c0_i32_0 : i32, i32
  }
  func.func @transform_4(%arg0: i32) -> (i32, i32) {
    %c0_i32 = arith.constant 0 : i32
    %c0_i32_0 = arith.constant 0 : i32
    %c0_i32_1 = arith.constant 0 : i32
    return %c0_i32, %c0_i32_0 : i32, i32
  }
  func.func @transform_5(%arg0: i32) -> (i32, i32) {
    %c0_i32 = arith.constant 0 : i32
    %c0_i32_0 = arith.constant 0 : i32
    %c0_i32_1 = arith.constant 0 : i32
    return %c0_i32, %c0_i32_0 : i32, i32
  }
  func.func @transform_6(%arg0: i32) -> (i32, i32) {
    %c0_i32 = arith.constant 0 : i32
    %c0_i32_0 = arith.constant 0 : i32
    %c0_i32_1 = arith.constant 0 : i32
    return %c0_i32, %c0_i32_0 : i32, i32
  }
  func.func @transform_7(%arg0: i32) -> (i32, i32) {
    %c0_i32 = arith.constant 0 : i32
    %c0_i32_0 = arith.constant 0 : i32
    %c0_i32_1 = arith.constant 0 : i32
    return %c0_i32, %c0_i32_0 : i32, i32
  }
  func.func @transform_8(%arg0: i32) -> (i32, i32) {
    %c0_i32 = arith.constant 0 : i32
    %c0_i32_0 = arith.constant 0 : i32
    %c0_i32_1 = arith.constant 0 : i32
    return %c0_i32, %c0_i32_0 : i32, i32
  }
  func.func @transform_9(%arg0: i32) -> (i32, i32) {
    %c0_i32 = arith.constant 0 : i32
    %c0_i32_0 = arith.constant 0 : i32
    %c0_i32_1 = arith.constant 0 : i32
    return %c0_i32, %c0_i32_0 : i32, i32
  }
  func.func @transform_10(%arg0: i32) -> (i32, i32) {
    %c0_i32 = arith.constant 0 : i32
    %c0_i32_0 = arith.constant 0 : i32
    %c0_i32_1 = arith.constant 0 : i32
    return %c0_i32, %c0_i32_0 : i32, i32
  }
  func.func @transform_11(%arg0: i32) -> (i32, i32) {
    %c0_i32 = arith.constant 0 : i32
    %c0_i32_0 = arith.constant 0 : i32
    %c0_i32_1 = arith.constant 0 : i32
    return %c0_i32, %c0_i32_0 : i32, i32
  }
  func.func @transform_12(%arg0: i32) -> (i32, i32, i32, i32) {
    %c0_i32 = arith.constant 0 : i32
    %c0_i32_0 = arith.constant 0 : i32
    %c0_i32_1 = arith.constant 0 : i32
    %c0_i32_2 = arith.constant 0 : i32
    return %arg0, %c0_i32, %c0_i32_0, %c0_i32_1 : i32, i32, i32, i32
  }
}

</mosaic_0001>

<llo_original>
// kernel: _lambda_.1
$region0: #{_lambda_.1}
  #allocation0 [shape = 'u32[]', space=smem, size = 0x4, offset = 0x4, fixed_abs, tag = 'smem constant byte address 0x4 - core index']
  #allocation1 [shape = 'u32[72,128]{1,0:T(1,128)}', space=vmem, size = 0x9000, scoped, tag = 'internal scratch']
  %s0 = inlined_call_operand.vmem [shape: bf16[2,172,32], index: 0, kind: input, shape index: {}]
  %s1 = inlined_call_operand.vmem [shape: f32[36,1], index: 1, kind: input, shape index: {}]
  %s2 = inlined_call_operand.vmem [shape: bf16[32,8], index: 2, kind: input, shape index: {}]
  %s3 = inlined_call_operand.vmem [shape: bf16[72,16], index: 3, kind: input, shape index: {}]
  %s4 = inlined_call_operand.vmem [shape: f32[1,16], index: 4, kind: input, shape index: {}]
  %s5 = inlined_call_operand.vmem [shape: bf16[8,16], index: 5, kind: input, shape index: {}]
  %s6 = inlined_call_operand.vmem [shape: bf16[16,16], index: 6, kind: input, shape index: {}]
  %s7 = inlined_call_operand.vmem [shape: f32[1,16], index: 7, kind: input, shape index: {}]
  %s8 = inlined_call_operand.vmem [shape: bf16[144,16], index: 8, kind: input, shape index: {}]
  %s9 = inlined_call_operand.vmem [shape: f32[1,16], index: 9, kind: input, shape index: {}]
  %s10 = inlined_call_operand.vmem [shape: bf16[16,5], index: 10, kind: input, shape index: {}]
  %s11 = inlined_call_operand.vmem [shape: f32[1,5], index: 11, kind: input, shape index: {}]
  %s12 = inlined_call_operand.vmem [shape: f32[2,4,36,5], index: 12, kind: output, shape index: {}]
  %s13 = sld [smem:[#allocation0]]
  $region81: #{_lambda_.1} parent=0
    _
  %s15 = ssub.s32 1, %s13
  %s16 = scalar_select 0, %s15, %s13
  loop: start=0, step=1, limit=4
  $region2: #{_lambda_.1} parent=0 // loop_pre_header
    _
  $region3: #{_lambda_.1} parent=0 // loop_header
    %s18 = sphi 0, %s22
    %p19 = scmp.ge.s32.totalorder %s18, 4
    %s28 = sphi 0, %s30
    %s31 = sphi 0, %s28
    %s32 = sphi 0, %s31
    %s48 = sphi 0, %s32
    %s52 = sphi 0, %s52
    %s54 = sphi 0, %s52
    %s55 = sphi 0, %s54
    %s69 = sphi 0, %s55
    %s73 = sphi 0, %s73
    %s75 = sphi 0, %s73
    %s76 = sphi 0, %s75
    %s90 = sphi 0, %s76
    %s94 = sphi 0, %s94
    %s96 = sphi 0, %s94
    %s97 = sphi 0, %s96
    %s111 = sphi 0, %s97
    %s115 = sphi 0, %s115
    %s117 = sphi 0, %s115
    %s118 = sphi 0, %s117
    %s132 = sphi 0, %s118
    %s136 = sphi 0, %s136
    %s138 = sphi 0, %s136
    %s139 = sphi 0, %s138
    %s153 = sphi 0, %s139
    %s157 = sphi 0, %s157
    %s159 = sphi 0, %s157
    %s160 = sphi 0, %s159
    %s174 = sphi 0, %s160
    %s178 = sphi 0, %s178
    %s180 = sphi 0, %s178
    %s181 = sphi 0, %s180
    %s195 = sphi 0, %s181
    %s199 = sphi 0, %s199
    %s201 = sphi 0, %s199
    %s202 = sphi 0, %s201
    %s216 = sphi 0, %s202
    %s220 = sphi 0, %s220
    %s222 = sphi 0, %s220
    %s223 = sphi 0, %s222
    %s237 = sphi 0, %s223
    %s241 = sphi 0, %s241
    %s243 = sphi 0, %s241
    %s244 = sphi 0, %s243
    %s258 = sphi 0, %s244
    %s262 = sphi 0, %s262
    %s264 = sphi 0, %s262
    %s265 = sphi 0, %s264
    %s279 = sphi 0, %s265
    %s285 = sphi 0, %s287
    %s288 = sphi 0, %s285
    %s289 = sphi 0, %s288
    %s305 = sphi 0, %s289
  $region4: #{_lambda_.1} parent=0 // loop_header_branch
    %21 = sbr.rel (%p19) target = $region8
  $region5: #{_lambda_.1} parent=0 // loop_body
    %s23 = ssub.s32 %s18, 1
    %s24 = ssub.s32 %s18, 2
    %s25 = sadd.s32 %s18, 1
    %s26 = ssub.s32 %s18, %s25
    %p27 = scmp.eq.s32.totalorder %s26, 0
    %s29 = sadd.s32 %s28, 1
    %s30 = scalar_select %p27, %s28, %s29
    %p33 = pneg %p27
    %p34 = scmp.eq.s32.totalorder %s18, 1
    %p35 = por %p33, %p34
    %p36 = scmp.ne.s32.totalorder %s28, %s31
    %p37 = scmp.eq.s32.totalorder %s18, 0
    %p38 = por %p36, %p37
    %p39 = scmp.ne.s32.totalorder %s28, %s31
    %p40 = scmp.eq.s32.totalorder %s23, 1
    %p41 = por %p39, %p40
    %p42 = scmp.ne.s32.totalorder %s31, %s32
    %p43 = scmp.eq.s32.totalorder %s23, 0
    %p44 = por %p42, %p43
    %p45 = scmp.ne.s32.totalorder %s31, %s32
    %p46 = scmp.eq.s32.totalorder %s24, 1
    %p47 = por %p45, %p46
    %p49 = scmp.ne.s32.totalorder %s32, %s48
    %p50 = scmp.eq.s32.totalorder %s24, 0
    %p51 = por %p49, %p50
    %s53 = sadd.s32 %s52, 1
    %p56 = scmp.eq.s32.totalorder %s18, 1
    %p57 = scmp.ne.s32.totalorder %s52, %s54
    %p58 = scmp.eq.s32.totalorder %s18, 0
    %p59 = por %p57, %p58
    %p60 = scmp.ne.s32.totalorder %s52, %s54
    %p61 = scmp.eq.s32.totalorder %s23, 1
    %p62 = por %p60, %p61
    %p63 = scmp.ne.s32.totalorder %s54, %s55
    %p64 = scmp.eq.s32.totalorder %s23, 0
    %p65 = por %p63, %p64
    %p66 = scmp.ne.s32.totalorder %s54, %s55
    %p67 = scmp.eq.s32.totalorder %s24, 1
    %p68 = por %p66, %p67
    %p70 = scmp.ne.s32.totalorder %s55, %s69
    %p71 = scmp.eq.s32.totalorder %s24, 0
    %p72 = por %p70, %p71
    %s74 = sadd.s32 %s73, 1
    %p77 = scmp.eq.s32.totalorder %s18, 1
    %p78 = scmp.ne.s32.totalorder %s73, %s75
    %p79 = scmp.eq.s32.totalorder %s18, 0
    %p80 = por %p78, %p79
    %p81 = scmp.ne.s32.totalorder %s73, %s75
    %p82 = scmp.eq.s32.totalorder %s23, 1
    %p83 = por %p81, %p82
    %p84 = scmp.ne.s32.totalorder %s75, %s76
    %p85 = scmp.eq.s32.totalorder %s23, 0
    %p86 = por %p84, %p85
    %p87 = scmp.ne.s32.totalorder %s75, %s76
    %p88 = scmp.eq.s32.totalorder %s24, 1
    %p89 = por %p87, %p88
    %p91 = scmp.ne.s32.totalorder %s76, %s90
    %p92 = scmp.eq.s32.totalorder %s24, 0
    %p93 = por %p91, %p92
    %s95 = sadd.s32 %s94, 1
    %p98 = scmp.eq.s32.totalorder %s18, 1
    %p99 = scmp.ne.s32.totalorder %s94, %s96
    %p100 = scmp.eq.s32.totalorder %s18, 0
    %p101 = por %p99, %p100
    %p102 = scmp.ne.s32.totalorder %s94, %s96
    %p103 = scmp.eq.s32.totalorder %s23, 1
    %p104 = por %p102, %p103
    %p105 = scmp.ne.s32.totalorder %s96, %s97
    %p106 = scmp.eq.s32.totalorder %s23, 0
    %p107 = por %p105, %p106
    %p108 = scmp.ne.s32.totalorder %s96, %s97
    %p109 = scmp.eq.s32.totalorder %s24, 1
    %p110 = por %p108, %p109
    %p112 = scmp.ne.s32.totalorder %s97, %s111
    %p113 = scmp.eq.s32.totalorder %s24, 0
    %p114 = por %p112, %p113
    %s116 = sadd.s32 %s115, 1
    %p119 = scmp.eq.s32.totalorder %s18, 1
    %p120 = scmp.ne.s32.totalorder %s115, %s117
    %p121 = scmp.eq.s32.totalorder %s18, 0
    %p122 = por %p120, %p121
    %p123 = scmp.ne.s32.totalorder %s115, %s117
    %p124 = scmp.eq.s32.totalorder %s23, 1
    %p125 = por %p123, %p124
    %p126 = scmp.ne.s32.totalorder %s117, %s118
    %p127 = scmp.eq.s32.totalorder %s23, 0
    %p128 = por %p126, %p127
    %p129 = scmp.ne.s32.totalorder %s117, %s118
    %p130 = scmp.eq.s32.totalorder %s24, 1
    %p131 = por %p129, %p130
    %p133 = scmp.ne.s32.totalorder %s118, %s132
    %p134 = scmp.eq.s32.totalorder %s24, 0
    %p135 = por %p133, %p134
    %s137 = sadd.s32 %s136, 1
    %p140 = scmp.eq.s32.totalorder %s18, 1
    %p141 = scmp.ne.s32.totalorder %s136, %s138
    %p142 = scmp.eq.s32.totalorder %s18, 0
    %p143 = por %p141, %p142
    %p144 = scmp.ne.s32.totalorder %s136, %s138
    %p145 = scmp.eq.s32.totalorder %s23, 1
    %p146 = por %p144, %p145
    %p147 = scmp.ne.s32.totalorder %s138, %s139
    %p148 = scmp.eq.s32.totalorder %s23, 0
    %p149 = por %p147, %p148
    %p150 = scmp.ne.s32.totalorder %s138, %s139
    %p151 = scmp.eq.s32.totalorder %s24, 1
    %p152 = por %p150, %p151
    %p154 = scmp.ne.s32.totalorder %s139, %s153
    %p155 = scmp.eq.s32.totalorder %s24, 0
    %p156 = por %p154, %p155
    %s158 = sadd.s32 %s157, 1
    %p161 = scmp.eq.s32.totalorder %s18, 1
    %p162 = scmp.ne.s32.totalorder %s157, %s159
    %p163 = scmp.eq.s32.totalorder %s18, 0
    %p164 = por %p162, %p163
    %p165 = scmp.ne.s32.totalorder %s157, %s159
    %p166 = scmp.eq.s32.totalorder %s23, 1
    %p167 = por %p165, %p166
    %p168 = scmp.ne.s32.totalorder %s159, %s160
    %p169 = scmp.eq.s32.totalorder %s23, 0
    %p170 = por %p168, %p169
    %p171 = scmp.ne.s32.totalorder %s159, %s160
    %p172 = scmp.eq.s32.totalorder %s24, 1
    %p173 = por %p171, %p172
    %p175 = scmp.ne.s32.totalorder %s160, %s174
    %p176 = scmp.eq.s32.totalorder %s24, 0
    %p177 = por %p175, %p176
    %s179 = sadd.s32 %s178, 1
    %p182 = scmp.eq.s32.totalorder %s18, 1
    %p183 = scmp.ne.s32.totalorder %s178, %s180
    %p184 = scmp.eq.s32.totalorder %s18, 0
    %p185 = por %p183, %p184
    %p186 = scmp.ne.s32.totalorder %s178, %s180
    %p187 = scmp.eq.s32.totalorder %s23, 1
    %p188 = por %p186, %p187
    %p189 = scmp.ne.s32.totalorder %s180, %s181
    %p190 = scmp.eq.s32.totalorder %s23, 0
    %p191 = por %p189, %p190
    %p192 = scmp.ne.s32.totalorder %s180, %s181
    %p193 = scmp.eq.s32.totalorder %s24, 1
    %p194 = por %p192, %p193
    %p196 = scmp.ne.s32.totalorder %s181, %s195
    %p197 = scmp.eq.s32.totalorder %s24, 0
    %p198 = por %p196, %p197
    %s200 = sadd.s32 %s199, 1
    %p203 = scmp.eq.s32.totalorder %s18, 1
    %p204 = scmp.ne.s32.totalorder %s199, %s201
    %p205 = scmp.eq.s32.totalorder %s18, 0
    %p206 = por %p204, %p205
    %p207 = scmp.ne.s32.totalorder %s199, %s201
    %p208 = scmp.eq.s32.totalorder %s23, 1
    %p209 = por %p207, %p208
    %p210 = scmp.ne.s32.totalorder %s201, %s202
    %p211 = scmp.eq.s32.totalorder %s23, 0
    %p212 = por %p210, %p211
    %p213 = scmp.ne.s32.totalorder %s201, %s202
    %p214 = scmp.eq.s32.totalorder %s24, 1
    %p215 = por %p213, %p214
    %p217 = scmp.ne.s32.totalorder %s202, %s216
    %p218 = scmp.eq.s32.totalorder %s24, 0
    %p219 = por %p217, %p218
    %s221 = sadd.s32 %s220, 1
    %p224 = scmp.eq.s32.totalorder %s18, 1
    %p225 = scmp.ne.s32.totalorder %s220, %s222
    %p226 = scmp.eq.s32.totalorder %s18, 0
    %p227 = por %p225, %p226
    %p228 = scmp.ne.s32.totalorder %s220, %s222
    %p229 = scmp.eq.s32.totalorder %s23, 1
    %p230 = por %p228, %p229
    %p231 = scmp.ne.s32.totalorder %s222, %s223
    %p232 = scmp.eq.s32.totalorder %s23, 0
    %p233 = por %p231, %p232
    %p234 = scmp.ne.s32.totalorder %s222, %s223
    %p235 = scmp.eq.s32.totalorder %s24, 1
    %p236 = por %p234, %p235
    %p238 = scmp.ne.s32.totalorder %s223, %s237
    %p239 = scmp.eq.s32.totalorder %s24, 0
    %p240 = por %p238, %p239
    %s242 = sadd.s32 %s241, 1
    %p245 = scmp.eq.s32.totalorder %s18, 1
    %p246 = scmp.ne.s32.totalorder %s241, %s243
    %p247 = scmp.eq.s32.totalorder %s18, 0
    %p248 = por %p246, %p247
    %p249 = scmp.ne.s32.totalorder %s241, %s243
    %p250 = scmp.eq.s32.totalorder %s23, 1
    %p251 = por %p249, %p250
    %p252 = scmp.ne.s32.totalorder %s243, %s244
    %p253 = scmp.eq.s32.totalorder %s23, 0
    %p254 = por %p252, %p253
    %p255 = scmp.ne.s32.totalorder %s243, %s244
    %p256 = scmp.eq.s32.totalorder %s24, 1
    %p257 = por %p255, %p256
    %p259 = scmp.ne.s32.totalorder %s244, %s258
    %p260 = scmp.eq.s32.totalorder %s24, 0
    %p261 = por %p259, %p260
    %s263 = sadd.s32 %s262, 1
    %p266 = scmp.eq.s32.totalorder %s18, 1
    %p267 = scmp.ne.s32.totalorder %s262, %s264
    %p268 = scmp.eq.s32.totalorder %s18, 0
    %p269 = por %p267, %p268
    %p270 = scmp.ne.s32.totalorder %s262, %s264
    %p271 = scmp.eq.s32.totalorder %s23, 1
    %p272 = por %p270, %p271
    %p273 = scmp.ne.s32.totalorder %s264, %s265
    %p274 = scmp.eq.s32.totalorder %s23, 0
    %p275 = por %p273, %p274
    %p276 = scmp.ne.s32.totalorder %s264, %s265
    %p277 = scmp.eq.s32.totalorder %s24, 1
    %p278 = por %p276, %p277
    %p280 = scmp.ne.s32.totalorder %s265, %s279
    %p281 = scmp.eq.s32.totalorder %s24, 0
    %p282 = por %p280, %p281
    %s283 = ssub.s32 %s18, %s25
    %p284 = scmp.eq.s32.totalorder %s283, 0
    %s286 = sadd.s32 %s285, 1
    %s287 = scalar_select %p284, %s285, %s286
    %p290 = pneg %p284
    %p291 = scmp.eq.s32.totalorder %s18, 1
    %p292 = por %p290, %p291
    %p293 = scmp.ne.s32.totalorder %s285, %s288
    %p294 = scmp.eq.s32.totalorder %s18, 0
    %p295 = por %p293, %p294
    %p296 = scmp.ne.s32.totalorder %s285, %s288
    %p297 = scmp.eq.s32.totalorder %s23, 1
    %p298 = por %p296, %p297
    %p299 = scmp.ne.s32.totalorder %s288, %s289
    %p300 = scmp.eq.s32.totalorder %s23, 0
    %p301 = por %p299, %p300
    %p302 = scmp.ne.s32.totalorder %s288, %s289
    %p303 = scmp.eq.s32.totalorder %s24, 1
    %p304 = por %p302, %p303
    %p306 = scmp.ne.s32.totalorder %s289, %s305
    %p307 = scmp.eq.s32.totalorder %s24, 0
    %p308 = por %p306, %p307
    %p309 = scmp.le.s32.totalorder 1, %s18
    %p310 = scmp.lt.s32.totalorder %s18, 3
    %p311 = pnand %p309, %p310
    %p312 = pneg %p311
    // Predicated region
    $region9: #{_lambda_.1} parent=5 // pred_check
      _
    $region10: #{_lambda_.1} parent=5 // pred_check_branch
      %314 = sbr.rel (%p311) target = $region12
    $region11: #{_lambda_.1} parent=5 // pred_region
      %s315 = ssub.s32 %s18, 1
      // Predicated region
      $region13: #{_lambda_.1} parent=11 // pred_check
        %p316 = pneg %p65
      $region14: #{_lambda_.1} parent=11 // pred_check_branch
        %318 = sbr.rel (%p316) target = $region16
      $region15: #{_lambda_.1} parent=11 // pred_region
        _
      $region16: #{_lambda_.1} parent=11 // pred_fallthru
        _
      // Predicated region
      $region17: #{_lambda_.1} parent=11 // pred_check
        %p319 = pneg %p86
      $region18: #{_lambda_.1} parent=11 // pred_check_branch
        %321 = sbr.rel (%p319) target = $region20
      $region19: #{_lambda_.1} parent=11 // pred_region
        _
      $region20: #{_lambda_.1} parent=11 // pred_fallthru
        _
      // Predicated region
      $region21: #{_lambda_.1} parent=11 // pred_check
        %p322 = pneg %p107
      $region22: #{_lambda_.1} parent=11 // pred_check_branch
        %324 = sbr.rel (%p322) target = $region24
      $region23: #{_lambda_.1} parent=11 // pred_region
        _
      $region24: #{_lambda_.1} parent=11 // pred_fallthru
        _
      // Predicated region
      $region25: #{_lambda_.1} parent=11 // pred_check
        %p325 = pneg %p128
      $region26: #{_lambda_.1} parent=11 // pred_check_branch
        %327 = sbr.rel (%p325) target = $region28
      $region27: #{_lambda_.1} parent=11 // pred_region
        _
      $region28: #{_lambda_.1} parent=11 // pred_fallthru
        _
      // Predicated region
      $region29: #{_lambda_.1} parent=11 // pred_check
        %p328 = pneg %p149
      $region30: #{_lambda_.1} parent=11 // pred_check_branch
        %330 = sbr.rel (%p328) target = $region32
      $region31: #{_lambda_.1} parent=11 // pred_region
        _
      $region32: #{_lambda_.1} parent=11 // pred_fallthru
        _
      // Predicated region
      $region33: #{_lambda_.1} parent=11 // pred_check
        %p331 = pneg %p170
      $region34: #{_lambda_.1} parent=11 // pred_check_branch
        %333 = sbr.rel (%p331) target = $region36
      $region35: #{_lambda_.1} parent=11 // pred_region
        _
      $region36: #{_lambda_.1} parent=11 // pred_fallthru
        _
      // Predicated region
      $region37: #{_lambda_.1} parent=11 // pred_check
        %p334 = pneg %p191
      $region38: #{_lambda_.1} parent=11 // pred_check_branch
        %336 = sbr.rel (%p334) target = $region40
      $region39: #{_lambda_.1} parent=11 // pred_region
        _
      $region40: #{_lambda_.1} parent=11 // pred_fallthru
        _
      // Predicated region
      $region41: #{_lambda_.1} parent=11 // pred_check
        %p337 = pneg %p212
      $region42: #{_lambda_.1} parent=11 // pred_check_branch
        %339 = sbr.rel (%p337) target = $region44
      $region43: #{_lambda_.1} parent=11 // pred_region
        _
      $region44: #{_lambda_.1} parent=11 // pred_fallthru
        _
      // Predicated region
      $region45: #{_lambda_.1} parent=11 // pred_check
        %p340 = pneg %p233
      $region46: #{_lambda_.1} parent=11 // pred_check_branch
        %342 = sbr.rel (%p340) target = $region48
      $region47: #{_lambda_.1} parent=11 // pred_region
        _
      $region48: #{_lambda_.1} parent=11 // pred_fallthru
        _
      // Predicated region
      $region49: #{_lambda_.1} parent=11 // pred_check
        %p343 = pneg %p254
      $region50: #{_lambda_.1} parent=11 // pred_check_branch
        %345 = sbr.rel (%p343) target = $region52
      $region51: #{_lambda_.1} parent=11 // pred_region
        _
      $region52: #{_lambda_.1} parent=11 // pred_fallthru
        _
      // Predicated region
      $region53: #{_lambda_.1} parent=11 // pred_check
        %p346 = pneg %p275
      $region54: #{_lambda_.1} parent=11 // pred_check_branch
        %348 = sbr.rel (%p346) target = $region56
      $region55: #{_lambda_.1} parent=11 // pred_region
        _
      $region56: #{_lambda_.1} parent=11 // pred_fallthru
        _
    $region12: #{_lambda_.1} parent=5 // pred_fallthru
      _
    %p349 = scmp.lt.s32.totalorder %s18, 2
    // Predicated region
    $region57: #{_lambda_.1} parent=5 // pred_check
      %p350 = pneg %p349
    $region58: #{_lambda_.1} parent=5 // pred_check_branch
      %352 = sbr.rel (%p350) target = $region60
    $region59: #{_lambda_.1} parent=5 // pred_region
      // Predicated region
      $region61: #{_lambda_.1} parent=59 // pred_check
        %p353 = pneg %p38
      $region62: #{_lambda_.1} parent=59 // pred_check_branch
        %355 = sbr.rel (%p353) target = $region64
      $region63: #{_lambda_.1} parent=59 // pred_region
        %p356 = scmp.lt.s32.totalorder %s18, 1
        %s357 = scalar_select %p356, %s18, 1
        %s358 = smul.addr %s357, 22
        %s359 = smul.addr %s358, 4
        %s360 = scalar_lea.vmem %s0, %s359
      $region64: #{_lambda_.1} parent=59 // pred_fallthru
        _
    $region60: #{_lambda_.1} parent=5 // pred_fallthru
      _
    %p361 = scmp.le.s32.totalorder 1, %s18
    %p362 = scmp.lt.s32.totalorder %s18, 3
    %p363 = pnand %p361, %p362
    %p364 = pneg %p363
    // Predicated region
    $region65: #{_lambda_.1} parent=5 // pred_check
      _
    $region66: #{_lambda_.1} parent=5 // pred_check_branch
      %366 = sbr.rel (%p363) target = $region68
    $region67: #{_lambda_.1} parent=5 // pred_region
      %s367 = ssub.s32 %s18, 1
      %p368 = scmp.lt.s32.totalorder %s23, 1
      %s369 = scalar_select %p368, %s23, 1
      %s370 = smul.addr %s369, 22
      %s371 = smul.addr %s370, 4
      %s372 = scalar_lea.vmem %s0, %s371
      %p373 = pneg %p44
      %p374 = pneg %p41
      %p375 = pneg %p65
      %p376 = pneg %p62
      %p377 = pneg %p86
      %p378 = pneg %p83
      %p379 = pneg %p107
      %p380 = pneg %p104
      %p381 = pneg %p128
      %p382 = pneg %p125
      %p383 = pneg %p149
      %p384 = pneg %p146
      %p385 = pneg %p170
      %p386 = pneg %p167
      %p387 = pneg %p191
      %p388 = pneg %p188
      %p389 = pneg %p212
      %p390 = pneg %p209
      %p391 = pneg %p233
      %p392 = pneg %p230
      %p393 = pneg %p254
      %p394 = pneg %p251
      %p395 = pneg %p275
      %p396 = pneg %p272
      %p397 = pneg %p301
      %p398 = pneg %p298
      %p399 = scmp.lt.s32.totalorder %s23, 1
      %s400 = scalar_select %p399, %s23, 1
      %s401 = smul.addr %s400, 20
      %s402 = smul.addr %s401, 8
      %s403 = scalar_lea.vmem %s12, %s402
      %p404 = scmp.lt.s32.totalorder %s23, 1
      %s405 = scalar_select %p404, %s23, 1
      %s406 = smul.addr %s405, 22
      %s407 = smul.addr %s406, 4
      %s408 = scalar_lea.vmem %s0, %s407
      %p409 = scmp.lt.s32.totalorder %s23, 1
      %s410 = scalar_select %p409, %s23, 1
      %s411 = smul.addr %s410, 20
      %s412 = smul.addr %s411, 8
      %s413 = scalar_lea.vmem %s12, %s412
      %v415 = vld [vmem:[%s408] sm:$0xf]
      %v416 = vld [vmem:[%s408 + $0x4] sm:$0xf]
      %v417 = vld [vmem:[%s408 + $0x8] sm:$0xf]
      %v418 = vld [vmem:[%s408 + $0xc] sm:$0xf]
      %v419 = vld [vmem:[%s408 + $0x10] sm:$0xf]
      %v420 = vld [vmem:[%s408 + $0x14] sm:$0xf]
      %v421 = vld [vmem:[%s408 + $0x18] sm:$0xf]
      %v422 = vld [vmem:[%s408 + $0x1c] sm:$0xf]
      %v423 = vld [vmem:[%s408 + $0x20] sm:$0xf]
      %v424 = vld [vmem:[%s408 + $0x24] sm:$0xf]
      %v425 = vld [vmem:[%s408 + $0x28] sm:$0xf]
      %v426 = vld [vmem:[%s408 + $0x2c] sm:$0xf]
      %v427 = vld [vmem:[%s408 + $0x30] sm:$0xf]
      %v428 = vld [vmem:[%s408 + $0x34] sm:$0xf]
      %v429 = vld [vmem:[%s408 + $0x38] sm:$0xf]
      %v430 = vld [vmem:[%s408 + $0x3c] sm:$0xf]
      %v431 = vld [vmem:[%s408 + $0x40] sm:$0xf]
      %v432 = vld [vmem:[%s408 + $0x44] sm:$0xf]
      %v433 = vld [vmem:[%s408 + $0x48] sm:$0xf]
      %v434 = vld [vmem:[%s408 + $0x4c] sm:$0xf]
      %v435 = vld [vmem:[%s408 + $0x50] sm:$0xf]
      %v436 = vld [vmem:[%s408 + $0x54] sm:$0x3]
      %v437 = vld [vmem:[%s2] sm:$0xf]
      %v438 = vld [vmem:[%s2 + $0x4] sm:$0xf]
      %v439 = vld [vmem:[%s2 + $0x8] sm:$0xf]
      %v440 = vld [vmem:[%s2 + $0xc] sm:$0xf]
      %v463 = vunpack.c.l.b16 %v415
      %v464 = vunpack.c.l.b16 %v416
      %v465 = vunpack.c.l.b16 %v417
      %v466 = vunpack.c.l.b16 %v418
      %v467 = vunpack.c.l.b16 %v419
      %v468 = vunpack.c.l.b16 %v420
      %v469 = vunpack.c.l.b16 %v421
      %v470 = vunpack.c.l.b16 %v422
      %v471 = vunpack.c.l.b16 %v423
      %v472 = vunpack.c.l.b16 %v424
      %v473 = vunpack.c.l.b16 %v425
      %v474 = vunpack.c.l.b16 %v426
      %v475 = vunpack.c.l.b16 %v427
      %v476 = vunpack.c.l.b16 %v428
      %v477 = vunpack.c.l.b16 %v429
      %v478 = vunpack.c.l.b16 %v430
      %v479 = vunpack.c.l.b16 %v431
      %v480 = vunpack.c.l.b16 %v432
      %v481 = vunpack.c.l.b16 %v433
      %v482 = vunpack.c.l.b16 %v434
      %v483 = vunpack.c.l.b16 %v435
      %v484 = vunpack.c.l.b16 %v436
      %v485 = vpack.c.b16 %v464, %v463
      %v486 = vpack.c.b16 %v466, %v465
      %v487 = vpack.c.b16 %v468, %v467
      %v488 = vpack.c.b16 %v470, %v469
      %v489 = vpack.c.b16 %v472, %v471
      %v490 = vpack.c.b16 %v474, %v473
      %v491 = vpack.c.b16 %v476, %v475
      %v492 = vpack.c.b16 %v478, %v477
      %v493 = vpack.c.b16 %v480, %v479
      %v494 = vpack.c.b16 %v482, %v481
      %v495 = vpack.c.b16 %v484, %v483
      %v500 = vunpack.c.l.b16 %v437
      %v501 = vunpack.c.l.b16 %v438
      %v502 = vunpack.c.l.b16 %v439
      %v503 = vunpack.c.l.b16 %v440
      %v504 = vpack.c.b16 %v501, %v500
      %v505 = vpack.c.b16 %v503, %v502
      %vm508 = vcmask 261120
      %v510 = vsel %vm508, %v485, 0
      %v513 = vsel %vm508, %v486, 0
      %v516 = vsel %vm508, %v487, 0
      %v519 = vsel %vm508, %v488, 0
      %v522 = vsel %vm508, %v489, 0
      %v525 = vsel %vm508, %v490, 0
      %v528 = vsel %vm508, %v491, 0
      %v531 = vsel %vm508, %v492, 0
      %v534 = vsel %vm508, %v493, 0
      %v537 = vsel %vm508, %v494, 0
      %v540 = vsel %vm508, %v495, 0
      %542 = vmatpush.bf16.msra.mxu0 0
      %543 = vmatpush.bf16.msra.mxu0 0
      %544 = vmatpush.bf16.msra.mxu0 0
      %545 = vmatpush.bf16.msra.mxu0 0
      %546 = vmatpush.bf16.msra.mxu0 0
      %547 = vmatpush.bf16.msra.mxu0 0
      %548 = vmatpush.bf16.msra.mxu0 %v505
      %549 = vmatpush.bf16.msra.mxu0 %v504
      %550 = vmatmul.bf16.gmra.mxu0 %v510
      %v551 = vpop.f32.mrf.mxu0
      %v552 = vadd.f32 0.0, %v551
      %v553 = vpop.f32.mrf.mxu0
      %v554 = vadd.f32 0.0, %v553
      %555 = vmatmul.bf16.gmra.mxu0 %v513
      %v556 = vpop.f32.mrf.mxu0
      %v557 = vadd.f32 0.0, %v556
      %v558 = vpop.f32.mrf.mxu0
      %v559 = vadd.f32 0.0, %v558
      %560 = vmatmul.bf16.gmra.mxu0 %v516
      %v561 = vpop.f32.mrf.mxu0
      %v562 = vadd.f32 0.0, %v561
      %v563 = vpop.f32.mrf.mxu0
      %v564 = vadd.f32 0.0, %v563
      %565 = vmatmul.bf16.gmra.mxu0 %v519
      %v566 = vpop.f32.mrf.mxu0
      %v567 = vadd.f32 0.0, %v566
      %v568 = vpop.f32.mrf.mxu0
      %v569 = vadd.f32 0.0, %v568
      %570 = vmatmul.bf16.gmra.mxu0 %v522
      %v571 = vpop.f32.mrf.mxu0
      %v572 = vadd.f32 0.0, %v571
      %v573 = vpop.f32.mrf.mxu0
      %v574 = vadd.f32 0.0, %v573
      %575 = vmatmul.bf16.gmra.mxu0 %v525
      %v576 = vpop.f32.mrf.mxu0
      %v577 = vadd.f32 0.0, %v576
      %v578 = vpop.f32.mrf.mxu0
      %v579 = vadd.f32 0.0, %v578
      %580 = vmatmul.bf16.gmra.mxu0 %v528
      %v581 = vpop.f32.mrf.mxu0
      %v582 = vadd.f32 0.0, %v581
      %v583 = vpop.f32.mrf.mxu0
      %v584 = vadd.f32 0.0, %v583
      %585 = vmatmul.bf16.gmra.mxu0 %v531
      %v586 = vpop.f32.mrf.mxu0
      %v587 = vadd.f32 0.0, %v586
      %v588 = vpop.f32.mrf.mxu0
      %v589 = vadd.f32 0.0, %v588
      %590 = vmatmul.bf16.gmra.mxu0 %v534
      %v591 = vpop.f32.mrf.mxu0
      %v592 = vadd.f32 0.0, %v591
      %v593 = vpop.f32.mrf.mxu0
      %v594 = vadd.f32 0.0, %v593
      %595 = vmatmul.bf16.gmra.mxu0 %v537
      %v596 = vpop.f32.mrf.mxu0
      %v597 = vadd.f32 0.0, %v596
      %v598 = vpop.f32.mrf.mxu0
      %v599 = vadd.f32 0.0, %v598
      %600 = vmatmul.bf16.gmra.mxu0 %v540
      %v601 = vpop.f32.mrf.mxu0
      %v602 = vadd.f32 0.0, %v601
      %v603 = vpop.f32.mrf.mxu0
      %v604 = vadd.f32 0.0, %v603
      %605 = vdwg.mxu0
      %v606 = vmax.f32 %v552, 0.0
      %v607 = vmax.f32 %v554, 0.0
      %v608 = vmax.f32 %v557, 0.0
      %v609 = vmax.f32 %v559, 0.0
      %v610 = vmax.f32 %v562, 0.0
      %v611 = vmax.f32 %v564, 0.0
      %v612 = vmax.f32 %v567, 0.0
      %v613 = vmax.f32 %v569, 0.0
      %v614 = vmax.f32 %v572, 0.0
      %v615 = vmax.f32 %v574, 0.0
      %v616 = vmax.f32 %v577, 0.0
      %v617 = vmax.f32 %v579, 0.0
      %v618 = vmax.f32 %v582, 0.0
      %v619 = vmax.f32 %v584, 0.0
      %v620 = vmax.f32 %v587, 0.0
      %v621 = vmax.f32 %v589, 0.0
      %v622 = vmax.f32 %v592, 0.0
      %v623 = vmax.f32 %v594, 0.0
      %v624 = vmax.f32 %v597, 0.0
      %v625 = vmax.f32 %v599, 0.0
      %v626 = vmax.f32 %v602, 0.0
      %v627 = vmax.f32 %v604, 0.0
      %v628 = vpack.c.bf16 %v606, %v606
      %v629 = vpack.c.bf16 %v607, %v607
      %v630 = vpack.c.bf16 %v608, %v608
      %v631 = vpack.c.bf16 %v609, %v609
      %v632 = vpack.c.bf16 %v610, %v610
      %v633 = vpack.c.bf16 %v611, %v611
      %v634 = vpack.c.bf16 %v612, %v612
      %v635 = vpack.c.bf16 %v613, %v613
      %v636 = vpack.c.bf16 %v614, %v614
      %v637 = vpack.c.bf16 %v615, %v615
      %v638 = vpack.c.bf16 %v616, %v616
      %v639 = vpack.c.bf16 %v617, %v617
      %v640 = vpack.c.bf16 %v618, %v618
      %v641 = vpack.c.bf16 %v619, %v619
      %v642 = vpack.c.bf16 %v620, %v620
      %v643 = vpack.c.bf16 %v621, %v621
      %v644 = vpack.c.bf16 %v622, %v622
      %v645 = vpack.c.bf16 %v623, %v623
      %v646 = vpack.c.bf16 %v624, %v624
      %v647 = vpack.c.bf16 %v625, %v625
      %v648 = vpack.c.bf16 %v626, %v626
      %v649 = vpack.c.bf16 %v627, %v627
      %v655 = vunpack.c.l.b16 %v644
      %v656 = vunpack.c.l.b16 %v645
      %v657 = vunpack.c.l.b16 %v646
      %v658 = vunpack.c.l.b16 %v647
      %v659 = vunpack.c.l.b16 %v648
      %v660 = vpack.c.b16 %v656, %v655
      %v661 = vpack.c.b16 %v658, %v657
      %v662 = vpack.c.b16 %v659, %v659
      %v669 = vunpack.c.l.b16 %v638
      %v670 = vunpack.c.l.b16 %v639
      %v671 = vunpack.c.l.b16 %v640
      %v672 = vunpack.c.l.b16 %v641
      %v673 = vunpack.c.l.b16 %v642
      %v674 = vunpack.c.l.b16 %v643
      %v675 = vpack.c.b16 %v670, %v669
      %v676 = vpack.c.b16 %v672, %v671
      %v677 = vpack.c.b16 %v674, %v673
      %vm678 = vcmask 1044480
      %v679 = vrot.slane %v675, 3
      %v680 = vrot.slane %v676, 3
      %v681 = vsel %vm678, %v679, %v680
      %v682 = vrot.slane %v677, 3
      %v683 = vsel %vm678, %v680, %v682
      %684 = vrot.lane.b32.xlu0 %v681, 8
      %v685 = vpop.permute.xlu0 %684
      %686 = vrot.lane.b32.xlu0 %v683, 8
      %v687 = vpop.permute.xlu0 %686
      %688 = vrot.lane.b32.xlu0 %v682, 8
      %v689 = vpop.permute.xlu0 %688
      %vm690 = vsmask.f32 7424
      %v692 = vshrl.u32 %v660, 16
      %v694 = vshll.u32 %v660, 16
      %v696 = vrot.slane %v694, 1
      %v697 = vor.u32 %v692, %v696
      %v699 = vshll.u32 %v661, 16
      %v701 = vrot.slane %v699, 1
      %v702 = vsel %vm690, %v697, %v701
      %v703 = vshrl.u32 %v661, 16
      %v705 = vor.u32 %v703, %v701
      %v707 = vshll.u32 %v662, 16
      %v709 = vrot.slane %v707, 1
      %v710 = vsel %vm690, %v705, %v709
      %v711 = vshrl.u32 %v662, 16
      %v713 = vor.u32 %v711, %v709
      %714 = vrot.lane.b32.xlu0 %v702, 16
      %v715 = vpop.permute.xlu0 %714
      %716 = vrot.lane.b32.xlu0 %v710, 16
      %v717 = vpop.permute.xlu0 %716
      %718 = vrot.lane.b32.xlu0 %v713, 16
      %v719 = vpop.permute.xlu0 %718
      %v724 = vunpack.c.l.b16 %v634
      %v725 = vunpack.c.l.b16 %v635
      %v726 = vunpack.c.l.b16 %v636
      %v727 = vunpack.c.l.b16 %v637
      %v728 = vpack.c.b16 %v725, %v724
      %v729 = vpack.c.b16 %v727, %v726
      %v730 = vpack.c.b16 %v669, %v669
      %731 = vrot.lane.b32.xlu0 %v728, 24
      %v732 = vpop.permute.xlu0 %731
      %733 = vrot.lane.b32.xlu0 %v729, 24
      %v734 = vpop.permute.xlu0 %733
      %735 = vrot.lane.b32.xlu0 %v730, 24
      %v736 = vpop.permute.xlu0 %735
      %v743 = vunpack.c.l.b16 %v628
      %v744 = vunpack.c.l.b16 %v629
      %v745 = vunpack.c.l.b16 %v630
      %v746 = vunpack.c.l.b16 %v631
      %v747 = vunpack.c.l.b16 %v632
      %v748 = vunpack.c.l.b16 %v633
      %v749 = vpack.c.b16 %v744, %v743
      %v750 = vpack.c.b16 %v746, %v745
      %v751 = vpack.c.b16 %v748, %v747
      %v752 = vrot.slane %v749, 3
      %v753 = vrot.slane %v750, 3
      %v754 = vsel %vm678, %v752, %v753
      %v755 = vrot.slane %v751, 3
      %v756 = vsel %vm678, %v753, %v755
      %757 = vrot.lane.b32.xlu0 %v754, 32
      %v758 = vpop.permute.xlu0 %757
      %759 = vrot.lane.b32.xlu0 %v756, 32
      %v760 = vpop.permute.xlu0 %759
      %761 = vrot.lane.b32.xlu0 %v755, 32
      %v762 = vpop.permute.xlu0 %761
      %v764 = vshrl.u32 %v728, 16
      %v766 = vshll.u32 %v728, 16
      %v768 = vrot.slane %v766, 1
      %v769 = vor.u32 %v764, %v768
      %v771 = vshll.u32 %v729, 16
      %v773 = vrot.slane %v771, 1
      %v774 = vsel %vm690, %v769, %v773
      %v775 = vshrl.u32 %v729, 16
      %v777 = vor.u32 %v775, %v773
      %v779 = vshll.u32 %v730, 16
      %v781 = vrot.slane %v779, 1
      %v782 = vsel %vm690, %v777, %v781
      %v783 = vshrl.u32 %v730, 16
      %v785 = vor.u32 %v783, %v781
      %786 = vrot.lane.b32.xlu0 %v774, 40
      %v787 = vpop.permute.xlu0 %786
      %788 = vrot.lane.b32.xlu0 %v782, 40
      %v789 = vpop.permute.xlu0 %788
      %790 = vrot.lane.b32.xlu0 %v785, 40
      %v791 = vpop.permute.xlu0 %790
      %v793 = vunpack.c.l.b16 %v649
      %v794 = vpack.c.b16 %v793, %v659
      %v795 = vrot.slane %v660, 3
      %v796 = vrot.slane %v661, 3
      %v797 = vsel %vm678, %v795, %v796
      %v798 = vrot.slane %v794, 3
      %v799 = vsel %vm678, %v796, %v798
      %800 = vrot.lane.b32.xlu0 %v797, 48
      %v801 = vpop.permute.xlu0 %800
      %802 = vrot.lane.b32.xlu0 %v799, 48
      %v803 = vpop.permute.xlu0 %802
      %804 = vrot.lane.b32.xlu0 %v798, 48
      %v805 = vpop.permute.xlu0 %804
      %v806 = vpack.c.b16 %v671, %v670
      %v807 = vpack.c.b16 %v673, %v672
      %v808 = vpack.c.b16 %v655, %v674
      %vm809 = vcmask 1045504
      %v810 = vrot.slane %v806, 2
      %v811 = vrot.slane %v807, 2
      %v812 = vsel %vm809, %v810, %v811
      %v813 = vrot.slane %v808, 2
      %v814 = vsel %vm809, %v811, %v813
      %815 = vrot.lane.b32.xlu0 %v812, 56
      %v816 = vpop.permute.xlu0 %815
      %817 = vrot.lane.b32.xlu0 %v814, 56
      %v818 = vpop.permute.xlu0 %817
      %819 = vrot.lane.b32.xlu0 %v813, 56
      %v820 = vpop.permute.xlu0 %819
      %v821 = vpack.c.b16 %v657, %v656
      %v822 = vpack.c.b16 %v659, %v658
      %v823 = vpack.c.b16 %v793, %v793
      %vm824 = vsmask.f32 256
      %v826 = vshrl.u32 %v821, 16
      %v828 = vrot.slane %v826, 7
      %v829 = vshll.u32 %v821, 16
      %v831 = vor.u32 %v828, %v829
      %v833 = vshrl.u32 %v822, 16
      %v835 = vrot.slane %v833, 7
      %v836 = vshll.u32 %v822, 16
      %v838 = vor.u32 %v835, %v836
      %v839 = vsel %vm824, %v828, %v838
      %v841 = vshrl.u32 %v823, 16
      %v843 = vrot.slane %v841, 7
      %v844 = vshll.u32 %v823, 16
      %v846 = vor.u32 %v843, %v844
      %v847 = vsel %vm824, %v835, %v846
      %848 = vrot.lane.b32.xlu0 %v831, 64
      %v849 = vpop.permute.xlu0 %848
      %850 = vrot.lane.b32.xlu0 %v839, 64
      %v851 = vpop.permute.xlu0 %850
      %852 = vrot.lane.b32.xlu0 %v847, 64
      %v853 = vpop.permute.xlu0 %852
      %vm854 = vcmask 64512
      %v856 = vsel %vm854, %v660, %v685
      %v858 = vsel %vm854, %v661, %v687
      %v860 = vsel %vm854, %v662, %v689
      %vm861 = vcmask 130048
      %v863 = vsel %vm861, %v856, %v715
      %v865 = vsel %vm861, %v858, %v717
      %v867 = vsel %vm861, %v860, %v719
      %vm868 = vcmask 195584
      %v870 = vsel %vm868, %v863, %v732
      %v872 = vsel %vm868, %v865, %v734
      %v874 = vsel %vm868, %v867, %v736
      %v876 = vsel %vm508, %v870, %v758
      %v878 = vsel %vm508, %v872, %v760
      %v880 = vsel %vm508, %v874, %v762
      %vm881 = vcmask 326656
      %v883 = vsel %vm881, %v876, %v787
      %v885 = vsel %vm881, %v878, %v789
      %v887 = vsel %vm881, %v880, %v791
      %vm888 = vcmask 392192
      %v890 = vsel %vm888, %v883, %v801
      %v892 = vsel %vm888, %v885, %v803
      %v894 = vsel %vm888, %v887, %v805
      %vm895 = vcmask 457728
      %v897 = vsel %vm895, %v890, %v816
      %v899 = vsel %vm895, %v892, %v818
      %v901 = vsel %vm895, %v894, %v820
      %vm902 = vcmask 523264
      %v904 = vsel %vm902, %v897, %v849
      %v906 = vsel %vm902, %v899, %v851
      %v908 = vsel %vm902, %v901, %v853
      %v909 = vld [vmem:[%s3] sm:$0xf]
      %v910 = vld [vmem:[%s3 + $0x4] sm:$0xf]
      %v911 = vld [vmem:[%s3 + $0x8] sm:$0xf]
      %v912 = vld [vmem:[%s3 + $0xc] sm:$0xf]
      %v913 = vld [vmem:[%s3 + $0x10] sm:$0xf]
      %v914 = vld [vmem:[%s3 + $0x14] sm:$0xf]
      %v915 = vld [vmem:[%s3 + $0x18] sm:$0xf]
      %v916 = vld [vmem:[%s3 + $0x1c] sm:$0xf]
      %v917 = vld [vmem:[%s3 + $0x20] sm:$0xf]
      %v918 = vld [vmem:[%s4] sm:$0x1]
      %v920 = vperm.slane %v918, 0
      %v922 = vshrl.u32 %v904, 16
      %v924 = vshll.u32 %v904, 16
      %v926 = vrot.slane %v924, 1
      %v927 = vor.u32 %v922, %v926
      %v928 = vshll.u32 %v906, 16
      %v930 = vrot.slane %v928, 1
      %v931 = vsel %vm690, %v927, %v930
      %v932 = vshrl.u32 %v906, 16
      %v934 = vor.u32 %v932, %v930
      %v935 = vshll.u32 %v908, 16
      %v937 = vrot.slane %v935, 1
      %v938 = vsel %vm690, %v934, %v937
      %v939 = vshrl.u32 %v908, 16
      %v941 = vor.u32 %v939, %v937
      %v951 = vunpack.c.l.b16 %v909
      %v952 = vunpack.c.l.b16 %v910
      %v953 = vunpack.c.l.b16 %v911
      %v954 = vunpack.c.l.b16 %v912
      %v955 = vunpack.c.l.b16 %v913
      %v956 = vunpack.c.l.b16 %v914
      %v957 = vunpack.c.l.b16 %v915
      %v958 = vunpack.c.l.b16 %v916
      %v959 = vunpack.c.l.b16 %v917
      %v960 = vpack.c.b16 %v952, %v951
      %v961 = vpack.c.b16 %v954, %v953
      %v962 = vpack.c.b16 %v956, %v955
      %v963 = vpack.c.b16 %v958, %v957
      %v964 = vpack.c.b16 %v959, %v959
      %vm969 = vcmask 588800
      %v971 = vsel %vm969, %v931, 0
      %v974 = vsel %vm969, %v938, 0
      %v977 = vsel %vm969, %v941, 0
      %vm979 = vcmask 1043456
      %v981 = vsel %vm979, %v964, 0
      %983 = vmatpush.bf16.msra.mxu0 0
      %984 = vmatpush.bf16.msra.mxu0 0
      %985 = vmatpush.bf16.msra.mxu0 0
      %986 = vmatpush.bf16.msra.mxu0 %v981
      %987 = vmatpush.bf16.msra.mxu0 %v963
      %988 = vmatpush.bf16.msra.mxu0 %v962
      %989 = vmatpush.bf16.msra.mxu0 %v961
      %990 = vmatpush.bf16.msra.mxu0 %v960
      %991 = vmatmul.bf16.gmra.mxu0 %v971
      %v992 = vpop.f32.mrf.mxu0
      %v993 = vadd.f32 %v920, %v992
      %v994 = vpop.f32.mrf.mxu0
      %v995 = vadd.f32 %v920, %v994
      %996 = vmatmul.bf16.gmra.mxu0 %v974
      %v997 = vpop.f32.mrf.mxu0
      %v998 = vadd.f32 %v920, %v997
      %v999 = vpop.f32.mrf.mxu0
      %v1000 = vadd.f32 %v920, %v999
      %1001 = vmatmul.bf16.gmra.mxu0 %v977
      %v1002 = vpop.f32.mrf.mxu0
      %v1003 = vadd.f32 %v920, %v1002
      %v1004 = vpop.f32.mrf.mxu0
      %1005 = vdwg.mxu0
      %v1006 = vmax.f32 %v993, 0.0
      %v1007 = vmax.f32 %v995, 0.0
      %v1008 = vmax.f32 %v998, 0.0
      %v1009 = vmax.f32 %v1000, 0.0
      %v1010 = vmax.f32 %v1003, 0.0
      %v1011 = vpack.c.bf16 %v1007, %v1006
      %v1012 = vpack.c.bf16 %v1009, %v1008
      %v1013 = vpack.c.bf16 %v1010, %v1010
      %v1014 = vld [vmem:[%s6] sm:$0xf]
      %v1015 = vld [vmem:[%s6 + $0x4] sm:$0xf]
      %v1018 = vunpack.c.l.b16 %v1014
      %v1019 = vunpack.c.l.b16 %v1015
      %v1020 = vpack.c.b16 %v1019, %v1018
      %v1023 = vsel %vm861, %v1011, 0
      %v1026 = vsel %vm861, %v1012, 0
      %v1029 = vsel %vm861, %v1013, 0
      %1031 = vmatpush.bf16.msra.mxu0 0
      %1032 = vmatpush.bf16.msra.mxu0 0
      %1033 = vmatpush.bf16.msra.mxu0 0
      %1034 = vmatpush.bf16.msra.mxu0 0
      %1035 = vmatpush.bf16.msra.mxu0 0
      %1036 = vmatpush.bf16.msra.mxu0 0
      %1037 = vmatpush.bf16.msra.mxu0 0
      %1038 = vmatpush.bf16.msra.mxu0 %v1020
      %1039 = vmatmul.bf16.gmra.mxu0 %v1023
      %v1040 = vpop.f32.mrf.mxu0
      %v1041 = vadd.f32 0.0, %v1040
      %v1042 = vpop.f32.mrf.mxu0
      %v1043 = vadd.f32 0.0, %v1042
      %1044 = vmatmul.bf16.gmra.mxu0 %v1026
      %v1045 = vpop.f32.mrf.mxu0
      %v1046 = vadd.f32 0.0, %v1045
      %v1047 = vpop.f32.mrf.mxu0
      %v1048 = vadd.f32 0.0, %v1047
      %1049 = vmatmul.bf16.gmra.mxu0 %v1029
      %v1050 = vpop.f32.mrf.mxu0
      %v1051 = vadd.f32 0.0, %v1050
      %v1052 = vpop.f32.mrf.mxu0
      %1053 = vdwg.mxu0
      %v1054 = vld [vmem:[%s5] sm:$0xf]
      %v1056 = vsel %vm854, %v749, 0
      %v1059 = vsel %vm854, %v750, 0
      %v1062 = vsel %vm854, %v751, 0
      %v1064 = vsel %vm854, %v728, 0
      %v1066 = vsel %vm854, %v729, 0
      %v1069 = vsel %vm854, %v675, 0
      %v1072 = vsel %vm854, %v676, 0
      %v1075 = vsel %vm854, %v677, 0
      %v1077 = vsel %vm854, %v660, 0
      %v1079 = vsel %vm854, %v661, 0
      %v1082 = vsel %vm854, %v794, 0
      %v1085 = vsel %vm979, %v1054, 0
      %1087 = vmatpush.bf16.msra.mxu0 0
      %1088 = vmatpush.bf16.msra.mxu0 0
      %1089 = vmatpush.bf16.msra.mxu0 0
      %1090 = vmatpush.bf16.msra.mxu0 0
      %1091 = vmatpush.bf16.msra.mxu0 0
      %1092 = vmatpush.bf16.msra.mxu0 0
      %1093 = vmatpush.bf16.msra.mxu0 0
      %1094 = vmatpush.bf16.msra.mxu0 %v1085
      %1095 = vmatmul.bf16.gmra.mxu0 %v1056
      %v1096 = vpop.f32.mrf.mxu0
      %v1097 = vadd.f32 0.0, %v1096
      %v1098 = vpop.f32.mrf.mxu0
      %v1099 = vadd.f32 0.0, %v1098
      %1100 = vmatmul.bf16.gmra.mxu0 %v1059
      %v1101 = vpop.f32.mrf.mxu0
      %v1102 = vadd.f32 0.0, %v1101
      %v1103 = vpop.f32.mrf.mxu0
      %v1104 = vadd.f32 0.0, %v1103
      %1105 = vmatmul.bf16.gmra.mxu0 %v1062
      %v1106 = vpop.f32.mrf.mxu0
      %v1107 = vadd.f32 0.0, %v1106
      %v1108 = vpop.f32.mrf.mxu0
      %v1109 = vadd.f32 0.0, %v1108
      %1110 = vmatmul.bf16.gmra.mxu0 %v1064
      %v1111 = vpop.f32.mrf.mxu0
      %v1112 = vadd.f32 0.0, %v1111
      %v1113 = vpop.f32.mrf.mxu0
      %v1114 = vadd.f32 0.0, %v1113
      %1115 = vmatmul.bf16.gmra.mxu0 %v1066
      %v1116 = vpop.f32.mrf.mxu0
      %v1117 = vadd.f32 0.0, %v1116
      %v1118 = vpop.f32.mrf.mxu0
      %v1119 = vadd.f32 0.0, %v1118
      %1120 = vmatmul.bf16.gmra.mxu0 %v1069
      %v1121 = vpop.f32.mrf.mxu0
      %v1122 = vadd.f32 0.0, %v1121
      %v1123 = vpop.f32.mrf.mxu0
      %v1124 = vadd.f32 0.0, %v1123
      %1125 = vmatmul.bf16.gmra.mxu0 %v1072
      %v1126 = vpop.f32.mrf.mxu0
      %v1127 = vadd.f32 0.0, %v1126
      %v1128 = vpop.f32.mrf.mxu0
      %v1129 = vadd.f32 0.0, %v1128
      %1130 = vmatmul.bf16.gmra.mxu0 %v1075
      %v1131 = vpop.f32.mrf.mxu0
      %v1132 = vadd.f32 0.0, %v1131
      %v1133 = vpop.f32.mrf.mxu0
      %v1134 = vadd.f32 0.0, %v1133
      %1135 = vmatmul.bf16.gmra.mxu0 %v1077
      %v1136 = vpop.f32.mrf.mxu0
      %v1137 = vadd.f32 0.0, %v1136
      %v1138 = vpop.f32.mrf.mxu0
      %v1139 = vadd.f32 0.0, %v1138
      %1140 = vmatmul.bf16.gmra.mxu0 %v1079
      %v1141 = vpop.f32.mrf.mxu0
      %v1142 = vadd.f32 0.0, %v1141
      %v1143 = vpop.f32.mrf.mxu0
      %v1144 = vadd.f32 0.0, %v1143
      %1145 = vmatmul.bf16.gmra.mxu0 %v1082
      %v1146 = vpop.f32.mrf.mxu0
      %v1147 = vadd.f32 0.0, %v1146
      %v1148 = vpop.f32.mrf.mxu0
      %v1149 = vadd.f32 0.0, %v1148
      %1150 = vdwg.mxu0
      %v1151 = vld [vmem:[%s1] sm:$0xff]
      %v1152 = vld [vmem:[%s1 + $0x8] sm:$0xff]
      %v1153 = vld [vmem:[%s1 + $0x10] sm:$0xff]
      %v1154 = vld [vmem:[%s1 + $0x18] sm:$0xff]
      %v1155 = vld [vmem:[%s1 + $0x20] sm:$0xf]
      %vm1161 = vcmask 1046528
      %v1162 = vrot.slane %v1041, 1
      %v1163 = vrot.slane %v1043, 1
      %v1164 = vsel %vm1161, %v1162, %v1163
      %v1165 = vrot.slane %v1046, 1
      %v1166 = vsel %vm1161, %v1163, %v1165
      %v1167 = vrot.slane %v1048, 1
      %v1168 = vsel %vm1161, %v1165, %v1167
      %v1169 = vrot.slane %v1051, 1
      %v1170 = vsel %vm1161, %v1167, %v1169
      %v1177 = vadd.f32 %v1097, %v1162
      %v1178 = vadd.f32 %v1099, %v1164
      %v1179 = vadd.f32 %v1102, %v1166
      %v1180 = vadd.f32 %v1104, %v1168
      %v1181 = vadd.f32 %v1107, %v1170
      %v1182 = vadd.f32 %v1109, %v1169
      %v1183 = vld [vmem:[%s7] sm:$0x1]
      %v1185 = vperm.slane %v1183, 0
      %v1187 = vadd.f32 %v1177, %v1185
      %v1188 = vadd.f32 %v1178, %v1185
      %v1189 = vadd.f32 %v1179, %v1185
      %v1190 = vadd.f32 %v1180, %v1185
      %v1191 = vadd.f32 %v1181, %v1185
      %v1192 = vadd.f32 %v1182, %v1185
      %1194 = vset.pattern.permute.xlu0 0
      %1195 = vperm.xlu0 %1194, %v1151
      %v1196 = vpop.permute.xlu0 %1195
      %1199 = vset.pattern.permute.xlu0 0
      %1200 = vperm.xlu0 %1199, %v1152
      %v1201 = vpop.permute.xlu0 %1200
      %1204 = vset.pattern.permute.xlu0 0
      %1205 = vperm.xlu0 %1204, %v1153
      %v1206 = vpop.permute.xlu0 %1205
      %1209 = vset.pattern.permute.xlu0 0
      %1210 = vperm.xlu0 %1209, %v1154
      %v1211 = vpop.permute.xlu0 %1210
      %1214 = vset.pattern.permute.xlu0 0
      %1215 = vperm.xlu0 %1214, %v1155
      %v1216 = vpop.permute.xlu0 %1215
      %v1218 = vrot.slane %v1196, 1
      %v1219 = vrot.slane %v1201, 1
      %v1220 = vsel %vm1161, %v1218, %v1219
      %v1221 = vrot.slane %v1206, 1
      %v1222 = vsel %vm1161, %v1219, %v1221
      %v1223 = vrot.slane %v1211, 1
      %v1224 = vsel %vm1161, %v1221, %v1223
      %v1225 = vrot.slane %v1216, 1
      %v1226 = vsel %vm1161, %v1223, %v1225
      %v1233 = vmul.f32 %v1187, %v1218
      %v1234 = vmul.f32 %v1188, %v1220
      %v1235 = vmul.f32 %v1189, %v1222
      %v1236 = vmul.f32 %v1190, %v1224
      %v1237 = vmul.f32 %v1191, %v1226
      %v1238 = vmul.f32 %v1192, %v1225
      %v1239 = vpack.c.bf16 %v1233, %v1233
      %v1240 = vpack.c.bf16 %v1234, %v1234
      %v1241 = vpack.c.bf16 %v1235, %v1235
      %v1242 = vpack.c.bf16 %v1236, %v1236
      %v1243 = vpack.c.bf16 %v1237, %v1237
      %v1244 = vpack.c.bf16 %v1238, %v1238
      %v1251 = vunpack.c.l.b16 %v1239
      %v1252 = vunpack.c.l.b16 %v1240
      %v1253 = vunpack.c.l.b16 %v1241
      %v1254 = vunpack.c.l.b16 %v1242
      %v1255 = vunpack.c.l.b16 %v1243
      %v1256 = vunpack.c.l.b16 %v1244
      %v1257 = vpack.c.b16 %v1252, %v1251
      %v1258 = vpack.c.b16 %v1254, %v1253
      %v1259 = vpack.c.b16 %v1256, %v1255
      %vm1262 = vcmask 1043456
      %vm1263 = vsmask.f32 3328
      %vm1264 = vmand %vm1262, %vm1263
      %v1265 = vsel %vm1264, 0, %v1257
      %vm1266 = vsmask.f32 5376
      %vm1267 = vmand %vm809, %vm1266
      %v1268 = vsel %vm1267, %v1259, 0
      %vm1269 = vcmask 1041408
      %v1270 = vrot.slane %v1041, 6
      %v1271 = vrot.slane %v1043, 6
      %v1272 = vsel %vm1269, %v1270, %v1271
      %v1273 = vrot.slane %v1046, 6
      %v1274 = vsel %vm1269, %v1271, %v1273
      %v1275 = vrot.slane %v1048, 6
      %v1276 = vsel %vm1269, %v1273, %v1275
      %v1277 = vrot.slane %v1051, 6
      %v1278 = vsel %vm1269, %v1275, %v1277
      %v1284 = vadd.f32 %v1112, %v1270
      %v1285 = vadd.f32 %v1114, %v1272
      %v1286 = vadd.f32 %v1117, %v1274
      %v1287 = vadd.f32 %v1119, %v1276
      %v1288 = vadd.f32 %v1122, %v1278
      %v1289 = vadd.f32 %v1284, %v1185
      %v1290 = vadd.f32 %v1285, %v1185
      %v1291 = vadd.f32 %v1286, %v1185
      %v1292 = vadd.f32 %v1287, %v1185
      %v1293 = vadd.f32 %v1288, %v1185
      %v1294 = vrot.slane %v1196, 6
      %v1295 = vrot.slane %v1201, 6
      %v1296 = vsel %vm1269, %v1294, %v1295
      %v1297 = vrot.slane %v1206, 6
      %v1298 = vsel %vm1269, %v1295, %v1297
      %v1299 = vrot.slane %v1211, 6
      %v1300 = vsel %vm1269, %v1297, %v1299
      %v1301 = vrot.slane %v1216, 6
      %v1302 = vsel %vm1269, %v1299, %v1301
      %v1308 = vmul.f32 %v1289, %v1294
      %v1309 = vmul.f32 %v1290, %v1296
      %v1310 = vmul.f32 %v1291, %v1298
      %v1311 = vmul.f32 %v1292, %v1300
      %v1312 = vmul.f32 %v1293, %v1302
      %v1313 = vpack.c.bf16 %v1308, %v1308
      %v1314 = vpack.c.bf16 %v1309, %v1309
      %v1315 = vpack.c.bf16 %v1310, %v1310
      %v1316 = vpack.c.bf16 %v1311, %v1311
      %v1317 = vpack.c.bf16 %v1312, %v1312
      %v1323 = vunpack.c.l.b16 %v1313
      %v1324 = vunpack.c.l.b16 %v1314
      %v1325 = vunpack.c.l.b16 %v1315
      %v1326 = vunpack.c.l.b16 %v1316
      %v1327 = vunpack.c.l.b16 %v1317
      %v1328 = vpack.c.b16 %v1324, %v1323
      %v1329 = vpack.c.b16 %v1326, %v1325
      %v1330 = vpack.c.b16 %v1327, %v1327
      %vm1331 = vsmask.f32 2304
      %v1333 = vshrl.u32 %v1328, 16
      %v1335 = vrot.slane %v1333, 5
      %v1336 = vshll.u32 %v1328, 16
      %v1338 = vrot.slane %v1336, 6
      %v1339 = vor.u32 %v1335, %v1338
      %v1341 = vshrl.u32 %v1329, 16
      %v1343 = vrot.slane %v1341, 5
      %v1344 = vshll.u32 %v1329, 16
      %v1346 = vrot.slane %v1344, 6
      %v1347 = vor.u32 %v1343, %v1346
      %v1348 = vsel %vm1331, %v1339, %v1347
      %v1350 = vshrl.u32 %v1330, 16
      %v1352 = vrot.slane %v1350, 5
      %v1353 = vshll.u32 %v1330, 16
      %v1355 = vrot.slane %v1353, 6
      %v1356 = vor.u32 %v1352, %v1355
      %v1357 = vsel %vm1331, %v1347, %v1356
      %v1360 = vsel %vm1264, 0, %v1339
      %v1361 = vsel %vm1267, %v1357, 0
      %vm1362 = vcmask 1044480
      %v1363 = vrot.slane %v1041, 3
      %v1364 = vrot.slane %v1043, 3
      %v1365 = vsel %vm1362, %v1363, %v1364
      %v1366 = vrot.slane %v1046, 3
      %v1367 = vsel %vm1362, %v1364, %v1366
      %v1368 = vrot.slane %v1048, 3
      %v1369 = vsel %vm1362, %v1366, %v1368
      %v1370 = vrot.slane %v1051, 3
      %v1371 = vsel %vm1362, %v1368, %v1370
      %v1378 = vadd.f32 %v1124, %v1363
      %v1379 = vadd.f32 %v1127, %v1365
      %v1380 = vadd.f32 %v1129, %v1367
      %v1381 = vadd.f32 %v1132, %v1369
      %v1382 = vadd.f32 %v1134, %v1371
      %v1383 = vadd.f32 %v1137, %v1370
      %v1384 = vadd.f32 %v1378, %v1185
      %v1385 = vadd.f32 %v1379, %v1185
      %v1386 = vadd.f32 %v1380, %v1185
      %v1387 = vadd.f32 %v1381, %v1185
      %v1388 = vadd.f32 %v1382, %v1185
      %v1389 = vadd.f32 %v1383, %v1185
      %v1390 = vrot.slane %v1196, 3
      %v1391 = vrot.slane %v1201, 3
      %v1392 = vsel %vm1362, %v1390, %v1391
      %v1393 = vrot.slane %v1206, 3
      %v1394 = vsel %vm1362, %v1391, %v1393
      %v1395 = vrot.slane %v1211, 3
      %v1396 = vsel %vm1362, %v1393, %v1395
      %v1397 = vrot.slane %v1216, 3
      %v1398 = vsel %vm1362, %v1395, %v1397
      %v1405 = vmul.f32 %v1384, %v1390
      %v1406 = vmul.f32 %v1385, %v1392
      %v1407 = vmul.f32 %v1386, %v1394
      %v1408 = vmul.f32 %v1387, %v1396
      %v1409 = vmul.f32 %v1388, %v1398
      %v1410 = vmul.f32 %v1389, %v1397
      %v1411 = vpack.c.bf16 %v1405, %v1405
      %v1412 = vpack.c.bf16 %v1406, %v1406
      %v1413 = vpack.c.bf16 %v1407, %v1407
      %v1414 = vpack.c.bf16 %v1408, %v1408
      %v1415 = vpack.c.bf16 %v1409, %v1409
      %v1416 = vpack.c.bf16 %v1410, %v1410
      %v1423 = vunpack.c.l.b16 %v1411
      %v1424 = vunpack.c.l.b16 %v1412
      %v1425 = vunpack.c.l.b16 %v1413
      %v1426 = vunpack.c.l.b16 %v1414
      %v1427 = vunpack.c.l.b16 %v1415
      %v1428 = vunpack.c.l.b16 %v1416
      %v1429 = vpack.c.b16 %v1424, %v1423
      %v1430 = vpack.c.b16 %v1426, %v1425
      %v1431 = vpack.c.b16 %v1428, %v1427
      %vm1432 = vcmask 1040384
      %v1433 = vrot.slane %v1429, 7
      %v1434 = vrot.slane %v1430, 7
      %v1435 = vsel %vm1432, %v1433, %v1434
      %v1436 = vrot.slane %v1431, 7
      %v1437 = vsel %vm1432, %v1434, %v1436
      %v1440 = vsel %vm1264, 0, %v1433
      %v1441 = vsel %vm1267, %v1437, 0
      %v1442 = vadd.f32 %v1139, %v1041
      %v1443 = vadd.f32 %v1142, %v1043
      %v1444 = vadd.f32 %v1144, %v1046
      %v1445 = vadd.f32 %v1147, %v1048
      %v1446 = vadd.f32 %v1149, %v1051
      %v1447 = vadd.f32 %v1442, %v1185
      %v1448 = vadd.f32 %v1443, %v1185
      %v1449 = vadd.f32 %v1444, %v1185
      %v1450 = vadd.f32 %v1445, %v1185
      %v1451 = vadd.f32 %v1446, %v1185
      %v1452 = vmul.f32 %v1447, %v1196
      %v1453 = vmul.f32 %v1448, %v1201
      %v1454 = vmul.f32 %v1449, %v1206
      %v1455 = vmul.f32 %v1450, %v1211
      %v1456 = vmul.f32 %v1451, %v1216
      %v1457 = vpack.c.bf16 %v1452, %v1452
      %v1458 = vpack.c.bf16 %v1453, %v1453
      %v1459 = vpack.c.bf16 %v1454, %v1454
      %v1460 = vpack.c.bf16 %v1455, %v1455
      %v1461 = vpack.c.bf16 %v1456, %v1456
      %v1467 = vunpack.c.l.b16 %v1457
      %v1468 = vunpack.c.l.b16 %v1458
      %v1469 = vunpack.c.l.b16 %v1459
      %v1470 = vunpack.c.l.b16 %v1460
      %v1471 = vunpack.c.l.b16 %v1461
      %v1472 = vpack.c.b16 %v1468, %v1467
      %v1473 = vpack.c.b16 %v1470, %v1469
      %v1474 = vpack.c.b16 %v1471, %v1471
      %v1476 = vshrl.u32 %v1472, 16
      %v1478 = vrot.slane %v1476, 4
      %v1479 = vshll.u32 %v1472, 16
      %v1481 = vrot.slane %v1479, 5
      %v1482 = vor.u32 %v1478, %v1481
      %v1484 = vshrl.u32 %v1473, 16
      %v1486 = vrot.slane %v1484, 4
      %v1487 = vshll.u32 %v1473, 16
      %v1489 = vrot.slane %v1487, 5
      %v1490 = vor.u32 %v1486, %v1489
      %v1491 = vsel %vm1263, %v1482, %v1490
      %v1493 = vshrl.u32 %v1474, 16
      %v1495 = vrot.slane %v1493, 4
      %v1496 = vshll.u32 %v1474, 16
      %v1498 = vrot.slane %v1496, 5
      %v1499 = vor.u32 %v1495, %v1498
      %v1500 = vsel %vm1263, %v1490, %v1499
      %v1503 = vsel %vm1264, 0, %v1482
      %v1504 = vsel %vm1267, %v1500, 0
      %v1506 = vshrl.u32 %v1440, 16
      %v1508 = vshll.u32 %v1440, 16
      %v1510 = vrot.slane %v1508, 1
      %v1511 = vor.u32 %v1506, %v1510
      %v1513 = vshll.u32 %v1435, 16
      %v1515 = vrot.slane %v1513, 1
      %v1516 = vsel %vm690, %v1511, %v1515
      %v1517 = vshrl.u32 %v1435, 16
      %v1519 = vor.u32 %v1517, %v1515
      %v1521 = vshll.u32 %v1441, 16
      %v1523 = vrot.slane %v1521, 1
      %v1524 = vsel %vm690, %v1519, %v1523
      %v1525 = vshrl.u32 %v1441, 16
      %v1527 = vor.u32 %v1525, %v1523
      %1528 = vrot.lane.b32.xlu0 %v1516, 16
      %v1529 = vpop.permute.xlu0 %1528
      %1530 = vrot.lane.b32.xlu0 %v1524, 16
      %v1531 = vpop.permute.xlu0 %1530
      %1532 = vrot.lane.b32.xlu0 %v1527, 16
      %v1533 = vpop.permute.xlu0 %1532
      %v1535 = vshrl.u32 %v1503, 16
      %v1537 = vshll.u32 %v1503, 16
      %v1539 = vrot.slane %v1537, 1
      %v1540 = vor.u32 %v1535, %v1539
      %v1542 = vshll.u32 %v1491, 16
      %v1544 = vrot.slane %v1542, 1
      %v1545 = vsel %vm690, %v1540, %v1544
      %v1546 = vshrl.u32 %v1491, 16
      %v1548 = vor.u32 %v1546, %v1544
      %v1550 = vshll.u32 %v1504, 16
      %v1552 = vrot.slane %v1550, 1
      %v1553 = vsel %vm690, %v1548, %v1552
      %v1554 = vshrl.u32 %v1504, 16
      %v1556 = vor.u32 %v1554, %v1552
      %1557 = vrot.lane.b32.xlu0 %v1545, 32
      %v1558 = vpop.permute.xlu0 %1557
      %1559 = vrot.lane.b32.xlu0 %v1553, 32
      %v1560 = vpop.permute.xlu0 %1559
      %1561 = vrot.lane.b32.xlu0 %v1556, 32
      %v1562 = vpop.permute.xlu0 %1561
      %v1565 = vrot.slane %v1360, 3
      %v1566 = vrot.slane %v1348, 3
      %v1567 = vsel %vm678, %v1565, %v1566
      %v1568 = vrot.slane %v1361, 3
      %v1569 = vsel %vm678, %v1566, %v1568
      %1570 = vrot.lane.b32.xlu0 %v1567, 48
      %v1571 = vpop.permute.xlu0 %1570
      %1572 = vrot.lane.b32.xlu0 %v1569, 48
      %v1573 = vpop.permute.xlu0 %1572
      %1574 = vrot.lane.b32.xlu0 %v1568, 48
      %v1575 = vpop.permute.xlu0 %1574
      %vm1576 = vsmask.f32 4352
      %v1578 = vshrl.u32 %v1265, 16
      %v1580 = vrot.slane %v1578, 3
      %v1581 = vshll.u32 %v1265, 16
      %v1583 = vrot.slane %v1581, 4
      %v1584 = vor.u32 %v1580, %v1583
      %v1586 = vshrl.u32 %v1258, 16
      %v1588 = vrot.slane %v1586, 3
      %v1589 = vshll.u32 %v1258, 16
      %v1591 = vrot.slane %v1589, 4
      %v1592 = vor.u32 %v1588, %v1591
      %v1593 = vsel %vm1576, %v1584, %v1592
      %v1595 = vshrl.u32 %v1268, 16
      %v1597 = vrot.slane %v1595, 3
      %v1598 = vshll.u32 %v1268, 16
      %v1600 = vrot.slane %v1598, 4
      %v1601 = vor.u32 %v1597, %v1600
      %v1602 = vsel %vm1576, %v1592, %v1601
      %1603 = vrot.lane.b32.xlu0 %v1593, 64
      %v1604 = vpop.permute.xlu0 %1603
      %1605 = vrot.lane.b32.xlu0 %v1602, 64
      %v1606 = vpop.permute.xlu0 %1605
      %1607 = vrot.lane.b32.xlu0 %v1601, 64
      %v1608 = vpop.permute.xlu0 %1607
      %v1610 = vshrl.u32 %v1360, 16
      %v1612 = vrot.slane %v1610, 3
      %v1613 = vshll.u32 %v1360, 16
      %v1615 = vrot.slane %v1613, 4
      %v1616 = vor.u32 %v1612, %v1615
      %v1618 = vshrl.u32 %v1348, 16
      %v1620 = vrot.slane %v1618, 3
      %v1621 = vshll.u32 %v1348, 16
      %v1623 = vrot.slane %v1621, 4
      %v1624 = vor.u32 %v1620, %v1623
      %v1625 = vsel %vm1576, %v1616, %v1624
      %v1627 = vshrl.u32 %v1361, 16
      %v1629 = vrot.slane %v1627, 3
      %v1630 = vshll.u32 %v1361, 16
      %v1632 = vrot.slane %v1630, 4
      %v1633 = vor.u32 %v1629, %v1632
      %v1634 = vsel %vm1576, %v1624, %v1633
      %1635 = vrot.lane.b32.xlu0 %v1625, 80
      %v1636 = vpop.permute.xlu0 %1635
      %1637 = vrot.lane.b32.xlu0 %v1634, 80
      %v1638 = vpop.permute.xlu0 %1637
      %1639 = vrot.lane.b32.xlu0 %v1633, 80
      %v1640 = vpop.permute.xlu0 %1639
      %v1643 = vrot.slane %v1503, 3
      %v1644 = vrot.slane %v1491, 3
      %v1645 = vsel %vm678, %v1643, %v1644
      %v1646 = vrot.slane %v1504, 3
      %v1647 = vsel %vm678, %v1644, %v1646
      %1648 = vrot.lane.b32.xlu0 %v1645, 96
      %v1649 = vpop.permute.xlu0 %1648
      %1650 = vrot.lane.b32.xlu0 %v1647, 96
      %v1651 = vpop.permute.xlu0 %1650
      %1652 = vrot.lane.b32.xlu0 %v1646, 96
      %v1653 = vpop.permute.xlu0 %1652
      %v1654 = vrot.slane %v1506, 3
      %v1655 = vrot.slane %v1508, 4
      %v1656 = vor.u32 %v1654, %v1655
      %v1657 = vrot.slane %v1517, 3
      %v1658 = vrot.slane %v1513, 4
      %v1659 = vor.u32 %v1657, %v1658
      %v1660 = vsel %vm1576, %v1656, %v1659
      %v1661 = vrot.slane %v1525, 3
      %v1662 = vrot.slane %v1521, 4
      %v1663 = vor.u32 %v1661, %v1662
      %v1664 = vsel %vm1576, %v1659, %v1663
      %1665 = vrot.lane.b32.xlu0 %v1660, 112
      %v1666 = vpop.permute.xlu0 %1665
      %1667 = vrot.lane.b32.xlu0 %v1664, 112
      %v1668 = vpop.permute.xlu0 %1667
      %1669 = vrot.lane.b32.xlu0 %v1663, 112
      %v1670 = vpop.permute.xlu0 %1669
      %v1671 = vrot.slane %v1535, 3
      %v1672 = vrot.slane %v1537, 4
      %v1673 = vor.u32 %v1671, %v1672
      %v1674 = vrot.slane %v1546, 3
      %v1675 = vrot.slane %v1542, 4
      %v1676 = vor.u32 %v1674, %v1675
      %v1677 = vsel %vm1576, %v1673, %v1676
      %v1678 = vrot.slane %v1554, 3
      %v1679 = vrot.slane %v1550, 4
      %v1680 = vor.u32 %v1678, %v1679
      %v1681 = vsel %vm1576, %v1676, %v1680
      %v1683 = vsel %vm861, %v1503, %v1529
      %v1685 = vsel %vm861, %v1491, %v1531
      %v1687 = vsel %vm861, %v1504, %v1533
      %v1689 = vsel %vm508, %v1683, %v1558
      %v1691 = vsel %vm508, %v1685, %v1560
      %v1693 = vsel %vm508, %v1687, %v1562
      %v1695 = vsel %vm888, %v1689, %v1571
      %v1697 = vsel %vm888, %v1691, %v1573
      %v1699 = vsel %vm888, %v1693, %v1575
      %v1701 = vsel %vm902, %v1695, %v1604
      %v1703 = vsel %vm902, %v1697, %v1606
      %v1705 = vsel %vm902, %v1699, %v1608
      %vm1706 = vcmask 654336
      %v1708 = vsel %vm1706, %v1701, %v1636
      %v1710 = vsel %vm1706, %v1703, %v1638
      %v1712 = vsel %vm1706, %v1705, %v1640
      %vm1713 = vcmask 785408
      %v1715 = vsel %vm1713, %v1708, %v1649
      %v1717 = vsel %vm1713, %v1710, %v1651
      %v1719 = vsel %vm1713, %v1712, %v1653
      %vm1720 = vcmask 916480
      %v1722 = vsel %vm1720, %v1715, %v1666
      %v1725 = vsel %vm1720, %v1717, %v1668
      %v1728 = vsel %vm1720, %v1719, %v1670
      %v1730 = vld [vmem:[%s8] sm:$0xf]
      %v1731 = vld [vmem:[%s8 + $0x4] sm:$0xf]
      %v1732 = vld [vmem:[%s8 + $0x8] sm:$0xf]
      %v1733 = vld [vmem:[%s8 + $0xc] sm:$0xf]
      %v1734 = vld [vmem:[%s8 + $0x10] sm:$0xf]
      %v1735 = vld [vmem:[%s8 + $0x14] sm:$0xf]
      %v1736 = vld [vmem:[%s8 + $0x18] sm:$0xf]
      %v1737 = vld [vmem:[%s8 + $0x1c] sm:$0xf]
      %v1738 = vld [vmem:[%s8 + $0x20] sm:$0xf]
      %v1739 = vld [vmem:[%s8 + $0x24] sm:$0xf]
      %v1740 = vld [vmem:[%s8 + $0x28] sm:$0xf]
      %v1741 = vld [vmem:[%s8 + $0x2c] sm:$0xf]
      %v1742 = vld [vmem:[%s8 + $0x30] sm:$0xf]
      %v1743 = vld [vmem:[%s8 + $0x34] sm:$0xf]
      %v1744 = vld [vmem:[%s8 + $0x38] sm:$0xf]
      %v1745 = vld [vmem:[%s8 + $0x3c] sm:$0xf]
      %v1746 = vld [vmem:[%s8 + $0x40] sm:$0xf]
      %v1747 = vld [vmem:[%s8 + $0x44] sm:$0xf]
      %v1748 = vld [vmem:[%s9] sm:$0x1]
      %v1750 = vperm.slane %v1748, 0
      %v1770 = vunpack.c.l.b16 %v1730
      %v1771 = vunpack.c.l.b16 %v1731
      %v1772 = vunpack.c.l.b16 %v1732
      %v1773 = vunpack.c.l.b16 %v1733
      %v1774 = vunpack.c.l.b16 %v1734
      %v1775 = vunpack.c.l.b16 %v1735
      %v1776 = vunpack.c.l.b16 %v1736
      %v1777 = vunpack.c.l.b16 %v1737
      %v1778 = vunpack.c.l.b16 %v1738
      %v1779 = vunpack.c.l.b16 %v1739
      %v1780 = vunpack.c.l.b16 %v1740
      %v1781 = vunpack.c.l.b16 %v1741
      %v1782 = vunpack.c.l.b16 %v1742
      %v1783 = vunpack.c.l.b16 %v1743
      %v1784 = vunpack.c.l.b16 %v1744
      %v1785 = vunpack.c.l.b16 %v1745
      %v1786 = vunpack.c.l.b16 %v1746
      %v1787 = vunpack.c.l.b16 %v1747
      %v1788 = vpack.c.b16 %v1771, %v1770
      %v1789 = vpack.c.b16 %v1773, %v1772
      %v1790 = vpack.c.b16 %v1775, %v1774
      %v1791 = vpack.c.b16 %v1777, %v1776
      %v1792 = vpack.c.b16 %v1779, %v1778
      %v1793 = vpack.c.b16 %v1781, %v1780
      %v1794 = vpack.c.b16 %v1783, %v1782
      %v1795 = vpack.c.b16 %v1785, %v1784
      %v1796 = vpack.c.b16 %v1787, %v1786
      %v1807 = vsel %vm861, %v1677, 0
      %v1810 = vsel %vm861, %v1681, 0
      %v1813 = vsel %vm861, %v1680, 0
      %1815 = vmatpush.bf16.msra.mxu0 %v1795
      %1816 = vmatpush.bf16.msra.mxu0 %v1794
      %1817 = vmatpush.bf16.msra.mxu0 %v1793
      %1818 = vmatpush.bf16.msra.mxu0 %v1792
      %1819 = vmatpush.bf16.msra.mxu0 %v1791
      %1820 = vmatpush.bf16.msra.mxu0 %v1790
      %1821 = vmatpush.bf16.msra.mxu0 %v1789
      %1822 = vmatpush.bf16.msra.mxu0 %v1788
      %1823 = vmatmul.bf16.gmra.mxu0 %v1722
      %v1824 = vpop.f32.mrf.mxu0
      %v1825 = vadd.f32 %v1750, %v1824
      %v1826 = vpop.f32.mrf.mxu0
      %v1827 = vadd.f32 %v1750, %v1826
      %1828 = vmatmul.bf16.gmra.mxu0 %v1725
      %v1829 = vpop.f32.mrf.mxu0
      %v1830 = vadd.f32 %v1750, %v1829
      %v1831 = vpop.f32.mrf.mxu0
      %v1832 = vadd.f32 %v1750, %v1831
      %1833 = vmatmul.bf16.gmra.mxu0 %v1728
      %v1834 = vpop.f32.mrf.mxu0
      %v1835 = vadd.f32 %v1750, %v1834
      %v1836 = vpop.f32.mrf.mxu0
      %1837 = vdwg.mxu0
      %1838 = vmatpush.bf16.msra.mxu0 0
      %1839 = vmatpush.bf16.msra.mxu0 0
      %1840 = vmatpush.bf16.msra.mxu0 0
      %1841 = vmatpush.bf16.msra.mxu0 0
      %1842 = vmatpush.bf16.msra.mxu0 0
      %1843 = vmatpush.bf16.msra.mxu0 0
      %1844 = vmatpush.bf16.msra.mxu0 0
      %1845 = vmatpush.bf16.msra.mxu0 %v1796
      %1846 = vmatmul.bf16.gmra.mxu0 %v1807
      %v1847 = vpop.f32.mrf.mxu0
      %v1848 = vadd.f32 %v1825, %v1847
      %v1849 = vpop.f32.mrf.mxu0
      %v1850 = vadd.f32 %v1827, %v1849
      %1851 = vmatmul.bf16.gmra.mxu0 %v1810
      %v1852 = vpop.f32.mrf.mxu0
      %v1853 = vadd.f32 %v1830, %v1852
      %v1854 = vpop.f32.mrf.mxu0
      %v1855 = vadd.f32 %v1832, %v1854
      %1856 = vmatmul.bf16.gmra.mxu0 %v1813
      %v1857 = vpop.f32.mrf.mxu0
      %v1858 = vadd.f32 %v1835, %v1857
      %v1859 = vpop.f32.mrf.mxu0
      %1860 = vdwg.mxu0
      %v1861 = vmax.f32 %v1848, 0.0
      %v1862 = vmax.f32 %v1850, 0.0
      %v1863 = vmax.f32 %v1853, 0.0
      %v1864 = vmax.f32 %v1855, 0.0
      %v1865 = vmax.f32 %v1858, 0.0
      %v1866 = vpack.c.bf16 %v1862, %v1861
      %v1867 = vpack.c.bf16 %v1864, %v1863
      %v1868 = vpack.c.bf16 %v1865, %v1865
      %v1869 = vld [vmem:[%s10] sm:$0xf]
      %v1870 = vld [vmem:[%s10 + $0x4] sm:$0xf]
      %v1871 = vld [vmem:[%s11] sm:$0x1]
      %v1873 = vperm.slane %v1871, 0
      %v1877 = vunpack.c.l.b16 %v1869
      %v1878 = vunpack.c.l.b16 %v1870
      %v1879 = vpack.c.b16 %v1878, %v1877
      %v1882 = vsel %vm861, %v1866, 0
      %v1885 = vsel %vm861, %v1867, 0
      %v1888 = vsel %vm861, %v1868, 0
      %1890 = vmatpush.bf16.msra.mxu0 0
      %1891 = vmatpush.bf16.msra.mxu0 0
      %1892 = vmatpush.bf16.msra.mxu0 0
      %1893 = vmatpush.bf16.msra.mxu0 0
      %1894 = vmatpush.bf16.msra.mxu0 0
      %1895 = vmatpush.bf16.msra.mxu0 0
      %1896 = vmatpush.bf16.msra.mxu0 0
      %1897 = vmatpush.bf16.msra.mxu0 %v1879
      %1898 = vmatmul.bf16.gmra.mxu0 %v1882
      %v1899 = vpop.f32.mrf.mxu0
      %v1900 = vadd.f32 %v1873, %v1899
      %v1901 = vpop.f32.mrf.mxu0
      %v1902 = vadd.f32 %v1873, %v1901
      %1903 = vmatmul.bf16.gmra.mxu0 %v1885
      %v1904 = vpop.f32.mrf.mxu0
      %v1905 = vadd.f32 %v1873, %v1904
      %v1906 = vpop.f32.mrf.mxu0
      %v1907 = vadd.f32 %v1873, %v1906
      %1908 = vmatmul.bf16.gmra.mxu0 %v1888
      %v1909 = vpop.f32.mrf.mxu0
      %v1910 = vadd.f32 %v1873, %v1909
      %v1911 = vpop.f32.mrf.mxu0
      %1912 = vdwg.mxu0
      %vm1913 = vcmask 39936
      %1914 = vst.msk [vmem:[%s413] sm:$0xff] %vm1913, %v1900
      %1915 = vst.msk [vmem:[%s413 + $0x8] sm:$0xff] %vm1913, %v1902
      %1916 = vst.msk [vmem:[%s413 + $0x10] sm:$0xff] %vm1913, %v1905
      %1917 = vst.msk [vmem:[%s413 + $0x18] sm:$0xff] %vm1913, %v1907
      %vm1918 = vcmask 35840
      %1919 = vst.msk [vmem:[%s413 + $0x20] sm:$0xf] %vm1918, %v1910
      %1920 = vrot.lane.b32.xlu0 %v1503, 16
      %v1921 = vpop.permute.xlu0 %1920
      %1922 = vrot.lane.b32.xlu0 %v1491, 16
      %v1923 = vpop.permute.xlu0 %1922
      %1924 = vrot.lane.b32.xlu0 %v1504, 16
      %v1925 = vpop.permute.xlu0 %1924
      %1926 = vrot.lane.b32.xlu0 %v1516, 32
      %v1927 = vpop.permute.xlu0 %1926
      %1928 = vrot.lane.b32.xlu0 %v1524, 32
      %v1929 = vpop.permute.xlu0 %1928
      %1930 = vrot.lane.b32.xlu0 %v1527, 32
      %v1931 = vpop.permute.xlu0 %1930
      %v1934 = vrot.slane %v1265, 3
      %v1935 = vrot.slane %v1258, 3
      %v1936 = vsel %vm678, %v1934, %v1935
      %v1937 = vrot.slane %v1268, 3
      %v1938 = vsel %vm678, %v1935, %v1937
      %1939 = vrot.lane.b32.xlu0 %v1936, 48
      %v1940 = vpop.permute.xlu0 %1939
      %1941 = vrot.lane.b32.xlu0 %v1938, 48
      %v1942 = vpop.permute.xlu0 %1941
      %1943 = vrot.lane.b32.xlu0 %v1937, 48
      %v1944 = vpop.permute.xlu0 %1943
      %1945 = vrot.lane.b32.xlu0 %v1567, 64
      %v1946 = vpop.permute.xlu0 %1945
      %1947 = vrot.lane.b32.xlu0 %v1569, 64
      %v1948 = vpop.permute.xlu0 %1947
      %1949 = vrot.lane.b32.xlu0 %v1568, 64
      %v1950 = vpop.permute.xlu0 %1949
      %1951 = vrot.lane.b32.xlu0 %v1593, 80
      %v1952 = vpop.permute.xlu0 %1951
      %1953 = vrot.lane.b32.xlu0 %v1602, 80
      %v1954 = vpop.permute.xlu0 %1953
      %1955 = vrot.lane.b32.xlu0 %v1601, 80
      %v1956 = vpop.permute.xlu0 %1955
      %v1959 = vrot.slane %v1440, 3
      %v1960 = vrot.slane %v1435, 3
      %v1961 = vsel %vm678, %v1959, %v1960
      %v1962 = vrot.slane %v1441, 3
      %v1963 = vsel %vm678, %v1960, %v1962
      %1964 = vrot.lane.b32.xlu0 %v1961, 96
      %v1965 = vpop.permute.xlu0 %1964
      %1966 = vrot.lane.b32.xlu0 %v1963, 96
      %v1967 = vpop.permute.xlu0 %1966
      %1968 = vrot.lane.b32.xlu0 %v1962, 96
      %v1969 = vpop.permute.xlu0 %1968
      %1970 = vrot.lane.b32.xlu0 %v1645, 112
      %v1971 = vpop.permute.xlu0 %1970
      %1972 = vrot.lane.b32.xlu0 %v1647, 112
      %v1973 = vpop.permute.xlu0 %1972
      %1974 = vrot.lane.b32.xlu0 %v1646, 112
      %v1975 = vpop.permute.xlu0 %1974
      %v1977 = vsel %vm861, %v1440, %v1921
      %v1979 = vsel %vm861, %v1435, %v1923
      %v1981 = vsel %vm861, %v1441, %v1925
      %v1983 = vsel %vm508, %v1977, %v1927
      %v1985 = vsel %vm508, %v1979, %v1929
      %v1987 = vsel %vm508, %v1981, %v1931
      %v1989 = vsel %vm888, %v1983, %v1940
      %v1991 = vsel %vm888, %v1985, %v1942
      %v1993 = vsel %vm888, %v1987, %v1944
      %v1995 = vsel %vm902, %v1989, %v1946
      %v1997 = vsel %vm902, %v1991, %v1948
      %v1999 = vsel %vm902, %v1993, %v1950
      %v2001 = vsel %vm1706, %v1995, %v1952
      %v2003 = vsel %vm1706, %v1997, %v1954
      %v2005 = vsel %vm1706, %v1999, %v1956
      %v2007 = vsel %vm1713, %v2001, %v1965
      %v2009 = vsel %vm1713, %v2003, %v1967
      %v2011 = vsel %vm1713, %v2005, %v1969
      %v2013 = vsel %vm1720, %v2007, %v1971
      %v2015 = vsel %vm1720, %v2009, %v1973
      %v2017 = vsel %vm1720, %v2011, %v1975
      %v2018 = vld [vmem:[%s8] sm:$0xf]
      %v2019 = vld [vmem:[%s8 + $0x4] sm:$0xf]
      %v2020 = vld [vmem:[%s8 + $0x8] sm:$0xf]
      %v2021 = vld [vmem:[%s8 + $0xc] sm:$0xf]
      %v2022 = vld [vmem:[%s8 + $0x10] sm:$0xf]
      %v2023 = vld [vmem:[%s8 + $0x14] sm:$0xf]
      %v2024 = vld [vmem:[%s8 + $0x18] sm:$0xf]
      %v2025 = vld [vmem:[%s8 + $0x1c] sm:$0xf]
      %v2026 = vld [vmem:[%s8 + $0x20] sm:$0xf]
      %v2027 = vld [vmem:[%s8 + $0x24] sm:$0xf]
      %v2028 = vld [vmem:[%s8 + $0x28] sm:$0xf]
      %v2029 = vld [vmem:[%s8 + $0x2c] sm:$0xf]
      %v2030 = vld [vmem:[%s8 + $0x30] sm:$0xf]
      %v2031 = vld [vmem:[%s8 + $0x34] sm:$0xf]
      %v2032 = vld [vmem:[%s8 + $0x38] sm:$0xf]
      %v2033 = vld [vmem:[%s8 + $0x3c] sm:$0xf]
      %v2034 = vld [vmem:[%s8 + $0x40] sm:$0xf]
      %v2035 = vld [vmem:[%s8 + $0x44] sm:$0xf]
      %v2036 = vld [vmem:[%s9] sm:$0x1]
      %v2038 = vperm.slane %v2036, 0
      %v2040 = vshrl.u32 %v2013, 16
      %v2042 = vshll.u32 %v2013, 16
      %v2044 = vrot.slane %v2042, 1
      %v2045 = vor.u32 %v2040, %v2044
      %v2046 = vshll.u32 %v2015, 16
      %v2048 = vrot.slane %v2046, 1
      %v2049 = vsel %vm690, %v2045, %v2048
      %v2051 = vshrl.u32 %v1660, 16
      %v2053 = vshll.u32 %v1660, 16
      %v2055 = vrot.slane %v2053, 1
      %v2056 = vor.u32 %v2051, %v2055
      %v2058 = vshll.u32 %v1664, 16
      %v2060 = vrot.slane %v2058, 1
      %v2061 = vsel %vm690, %v2056, %v2060
      %v2062 = vshrl.u32 %v2015, 16
      %v2064 = vor.u32 %v2062, %v2048
      %v2065 = vshll.u32 %v2017, 16
      %v2067 = vrot.slane %v2065, 1
      %v2068 = vsel %vm690, %v2064, %v2067
      %v2069 = vshrl.u32 %v1664, 16
      %v2071 = vor.u32 %v2069, %v2060
      %v2073 = vshll.u32 %v1663, 16
      %v2075 = vrot.slane %v2073, 1
      %v2076 = vsel %vm690, %v2071, %v2075
      %v2077 = vshrl.u32 %v2017, 16
      %v2079 = vor.u32 %v2077, %v2067
      %v2080 = vshrl.u32 %v1663, 16
      %v2082 = vor.u32 %v2080, %v2075
      %v2104 = vunpack.c.l.b16 %v2018
      %v2105 = vunpack.c.l.b16 %v2019
      %v2106 = vunpack.c.l.b16 %v2020
      %v2107 = vunpack.c.l.b16 %v2021
      %v2108 = vunpack.c.l.b16 %v2022
      %v2109 = vunpack.c.l.b16 %v2023
      %v2110 = vunpack.c.l.b16 %v2024
      %v2111 = vunpack.c.l.b16 %v2025
      %v2112 = vunpack.c.l.b16 %v2026
      %v2113 = vunpack.c.l.b16 %v2027
      %v2114 = vunpack.c.l.b16 %v2028
      %v2115 = vunpack.c.l.b16 %v2029
      %v2116 = vunpack.c.l.b16 %v2030
      %v2117 = vunpack.c.l.b16 %v2031
      %v2118 = vunpack.c.l.b16 %v2032
      %v2119 = vunpack.c.l.b16 %v2033
      %v2120 = vunpack.c.l.b16 %v2034
      %v2121 = vunpack.c.l.b16 %v2035
      %v2122 = vpack.c.b16 %v2105, %v2104
      %v2123 = vpack.c.b16 %v2107, %v2106
      %v2124 = vpack.c.b16 %v2109, %v2108
      %v2125 = vpack.c.b16 %v2111, %v2110
      %v2126 = vpack.c.b16 %v2113, %v2112
      %v2127 = vpack.c.b16 %v2115, %v2114
      %v2128 = vpack.c.b16 %v2117, %v2116
      %v2129 = vpack.c.b16 %v2119, %v2118
      %v2130 = vpack.c.b16 %v2121, %v2120
      %v2141 = vsel %vm861, %v2061, 0
      %v2144 = vsel %vm861, %v2076, 0
      %v2147 = vsel %vm861, %v2082, 0
      %2149 = vmatpush.bf16.msra.mxu0 %v2129
      %2150 = vmatpush.bf16.msra.mxu0 %v2128
      %2151 = vmatpush.bf16.msra.mxu0 %v2127
      %2152 = vmatpush.bf16.msra.mxu0 %v2126
      %2153 = vmatpush.bf16.msra.mxu0 %v2125
      %2154 = vmatpush.bf16.msra.mxu0 %v2124
      %2155 = vmatpush.bf16.msra.mxu0 %v2123
      %2156 = vmatpush.bf16.msra.mxu0 %v2122
      %2157 = vmatmul.bf16.gmra.mxu0 %v2049
      %v2158 = vpop.f32.mrf.mxu0
      %v2159 = vadd.f32 %v2038, %v2158
      %v2160 = vpop.f32.mrf.mxu0
      %v2161 = vadd.f32 %v2038, %v2160
      %2162 = vmatmul.bf16.gmra.mxu0 %v2068
      %v2163 = vpop.f32.mrf.mxu0
      %v2164 = vadd.f32 %v2038, %v2163
      %v2165 = vpop.f32.mrf.mxu0
      %v2166 = vadd.f32 %v2038, %v2165
      %2167 = vmatmul.bf16.gmra.mxu0 %v2079
      %v2168 = vpop.f32.mrf.mxu0
      %v2169 = vadd.f32 %v2038, %v2168
      %v2170 = vpop.f32.mrf.mxu0
      %2171 = vdwg.mxu0
      %2172 = vmatpush.bf16.msra.mxu0 0
      %2173 = vmatpush.bf16.msra.mxu0 0
      %2174 = vmatpush.bf16.msra.mxu0 0
      %2175 = vmatpush.bf16.msra.mxu0 0
      %2176 = vmatpush.bf16.msra.mxu0 0
      %2177 = vmatpush.bf16.msra.mxu0 0
      %2178 = vmatpush.bf16.msra.mxu0 0
      %2179 = vmatpush.bf16.msra.mxu0 %v2130
      %2180 = vmatmul.bf16.gmra.mxu0 %v2141
      %v2181 = vpop.f32.mrf.mxu0
      %v2182 = vadd.f32 %v2159, %v2181
      %v2183 = vpop.f32.mrf.mxu0
      %v2184 = vadd.f32 %v2161, %v2183
      %2185 = vmatmul.bf16.gmra.mxu0 %v2144
      %v2186 = vpop.f32.mrf.mxu0
      %v2187 = vadd.f32 %v2164, %v2186
      %v2188 = vpop.f32.mrf.mxu0
      %v2189 = vadd.f32 %v2166, %v2188
      %2190 = vmatmul.bf16.gmra.mxu0 %v2147
      %v2191 = vpop.f32.mrf.mxu0
      %v2192 = vadd.f32 %v2169, %v2191
      %v2193 = vpop.f32.mrf.mxu0
      %2194 = vdwg.mxu0
      %v2195 = vmax.f32 %v2182, 0.0
      %v2196 = vmax.f32 %v2184, 0.0
      %v2197 = vmax.f32 %v2187, 0.0
      %v2198 = vmax.f32 %v2189, 0.0
      %v2199 = vmax.f32 %v2192, 0.0
      %v2200 = vpack.c.bf16 %v2196, %v2195
      %v2201 = vpack.c.bf16 %v2198, %v2197
      %v2202 = vpack.c.bf16 %v2199, %v2199
      %v2203 = vld [vmem:[%s10] sm:$0xf]
      %v2204 = vld [vmem:[%s10 + $0x4] sm:$0xf]
      %v2205 = vld [vmem:[%s11] sm:$0x1]
      %v2207 = vperm.slane %v2205, 0
      %v2211 = vunpack.c.l.b16 %v2203
      %v2212 = vunpack.c.l.b16 %v2204
      %v2213 = vpack.c.b16 %v2212, %v2211
      %v2216 = vsel %vm861, %v2200, 0
      %v2219 = vsel %vm861, %v2201, 0
      %v2222 = vsel %vm861, %v2202, 0
      %2224 = vmatpush.bf16.msra.mxu0 0
      %2225 = vmatpush.bf16.msra.mxu0 0
      %2226 = vmatpush.bf16.msra.mxu0 0
      %2227 = vmatpush.bf16.msra.mxu0 0
      %2228 = vmatpush.bf16.msra.mxu0 0
      %2229 = vmatpush.bf16.msra.mxu0 0
      %2230 = vmatpush.bf16.msra.mxu0 0
      %2231 = vmatpush.bf16.msra.mxu0 %v2213
      %2232 = vmatmul.bf16.gmra.mxu0 %v2216
      %v2233 = vpop.f32.mrf.mxu0
      %v2234 = vadd.f32 %v2207, %v2233
      %v2235 = vpop.f32.mrf.mxu0
      %v2236 = vadd.f32 %v2207, %v2235
      %2237 = vmatmul.bf16.gmra.mxu0 %v2219
      %v2238 = vpop.f32.mrf.mxu0
      %v2239 = vadd.f32 %v2207, %v2238
      %v2240 = vpop.f32.mrf.mxu0
      %v2241 = vadd.f32 %v2207, %v2240
      %2242 = vmatmul.bf16.gmra.mxu0 %v2222
      %v2243 = vpop.f32.mrf.mxu0
      %v2244 = vadd.f32 %v2207, %v2243
      %v2245 = vpop.f32.mrf.mxu0
      %2246 = vdwg.mxu0
      %s2247 = scalar_lea.vmem %s413, 40
      %2248 = vst.msk [vmem:[%s2247] sm:$0xff] %vm1913, %v2234
      %2249 = vst.msk [vmem:[%s2247 + $0x8] sm:$0xff] %vm1913, %v2236
      %2250 = vst.msk [vmem:[%s2247 + $0x10] sm:$0xff] %vm1913, %v2239
      %2251 = vst.msk [vmem:[%s2247 + $0x18] sm:$0xff] %vm1913, %v2241
      %2252 = vst.msk [vmem:[%s2247 + $0x20] sm:$0xf] %vm1918, %v2244
      %v2253 = vrot.slane %v1581, 1
      %v2254 = vor.u32 %v1578, %v2253
      %v2255 = vrot.slane %v1589, 1
      %v2256 = vsel %vm690, %v2254, %v2255
      %v2257 = vor.u32 %v1586, %v2255
      %v2258 = vrot.slane %v1598, 1
      %v2259 = vsel %vm690, %v2257, %v2258
      %v2260 = vor.u32 %v1595, %v2258
      %2261 = vrot.lane.b32.xlu0 %v2256, 16
      %v2262 = vpop.permute.xlu0 %2261
      %2263 = vrot.lane.b32.xlu0 %v2259, 16
      %v2264 = vpop.permute.xlu0 %2263
      %2265 = vrot.lane.b32.xlu0 %v2260, 16
      %v2266 = vpop.permute.xlu0 %2265
      %v2267 = vrot.slane %v1613, 1
      %v2268 = vor.u32 %v1610, %v2267
      %v2269 = vrot.slane %v1621, 1
      %v2270 = vsel %vm690, %v2268, %v2269
      %v2271 = vor.u32 %v1618, %v2269
      %v2272 = vrot.slane %v1630, 1
      %v2273 = vsel %vm690, %v2271, %v2272
      %v2274 = vor.u32 %v1627, %v2272
      %2275 = vrot.lane.b32.xlu0 %v2270, 32
      %v2276 = vpop.permute.xlu0 %2275
      %2277 = vrot.lane.b32.xlu0 %v2273, 32
      %v2278 = vpop.permute.xlu0 %2277
      %2279 = vrot.lane.b32.xlu0 %v2274, 32
      %v2280 = vpop.permute.xlu0 %2279
      %2281 = vrot.lane.b32.xlu0 %v1503, 48
      %v2282 = vpop.permute.xlu0 %2281
      %2283 = vrot.lane.b32.xlu0 %v1491, 48
      %v2284 = vpop.permute.xlu0 %2283
      %2285 = vrot.lane.b32.xlu0 %v1504, 48
      %v2286 = vpop.permute.xlu0 %2285
      %2287 = vrot.lane.b32.xlu0 %v1516, 64
      %v2288 = vpop.permute.xlu0 %2287
      %2289 = vrot.lane.b32.xlu0 %v1524, 64
      %v2290 = vpop.permute.xlu0 %2289
      %2291 = vrot.lane.b32.xlu0 %v1527, 64
      %v2292 = vpop.permute.xlu0 %2291
      %2293 = vrot.lane.b32.xlu0 %v1545, 80
      %v2294 = vpop.permute.xlu0 %2293
      %2295 = vrot.lane.b32.xlu0 %v1553, 80
      %v2296 = vpop.permute.xlu0 %2295
      %2297 = vrot.lane.b32.xlu0 %v1556, 80
      %v2298 = vpop.permute.xlu0 %2297
      %2299 = vrot.lane.b32.xlu0 %v1567, 96
      %v2300 = vpop.permute.xlu0 %2299
      %2301 = vrot.lane.b32.xlu0 %v1569, 96
      %v2302 = vpop.permute.xlu0 %2301
      %2303 = vrot.lane.b32.xlu0 %v1568, 96
      %v2304 = vpop.permute.xlu0 %2303
      %v2306 = vshll.u32 0, 16
      %v2308 = vrot.slane %v2306, 4
      %v2309 = vsel %vm1576, %v1601, %v2308
      %2310 = vrot.lane.b32.xlu0 %v1593, 112
      %v2311 = vpop.permute.xlu0 %2310
      %2312 = vrot.lane.b32.xlu0 %v1602, 112
      %v2313 = vpop.permute.xlu0 %2312
      %2314 = vrot.lane.b32.xlu0 %v2309, 112
      %v2315 = vpop.permute.xlu0 %2314
      %v2316 = vsel %vm1576, %v1633, %v2308
      %v2318 = vsel %vm861, %v1360, %v2262
      %v2320 = vsel %vm861, %v1348, %v2264
      %v2322 = vsel %vm861, %v1361, %v2266
      %v2324 = vsel %vm508, %v2318, %v2276
      %v2326 = vsel %vm508, %v2320, %v2278
      %v2328 = vsel %vm508, %v2322, %v2280
      %v2330 = vsel %vm888, %v2324, %v2282
      %v2332 = vsel %vm888, %v2326, %v2284
      %v2334 = vsel %vm888, %v2328, %v2286
      %v2336 = vsel %vm902, %v2330, %v2288
      %v2338 = vsel %vm902, %v2332, %v2290
      %v2340 = vsel %vm902, %v2334, %v2292
      %v2342 = vsel %vm1706, %v2336, %v2294
      %v2344 = vsel %vm1706, %v2338, %v2296
      %v2346 = vsel %vm1706, %v2340, %v2298
      %v2348 = vsel %vm1713, %v2342, %v2300
      %v2350 = vsel %vm1713, %v2344, %v2302
      %v2352 = vsel %vm1713, %v2346, %v2304
      %v2354 = vsel %vm1720, %v2348, %v2311
      %v2356 = vsel %vm1720, %v2350, %v2313
      %v2358 = vsel %vm1720, %v2352, %v2315
      %v2359 = vld [vmem:[%s8] sm:$0xf]
      %v2360 = vld [vmem:[%s8 + $0x4] sm:$0xf]
      %v2361 = vld [vmem:[%s8 + $0x8] sm:$0xf]
      %v2362 = vld [vmem:[%s8 + $0xc] sm:$0xf]
      %v2363 = vld [vmem:[%s8 + $0x10] sm:$0xf]
      %v2364 = vld [vmem:[%s8 + $0x14] sm:$0xf]
      %v2365 = vld [vmem:[%s8 + $0x18] sm:$0xf]
      %v2366 = vld [vmem:[%s8 + $0x1c] sm:$0xf]
      %v2367 = vld [vmem:[%s8 + $0x20] sm:$0xf]
      %v2368 = vld [vmem:[%s8 + $0x24] sm:$0xf]
      %v2369 = vld [vmem:[%s8 + $0x28] sm:$0xf]
      %v2370 = vld [vmem:[%s8 + $0x2c] sm:$0xf]
      %v2371 = vld [vmem:[%s8 + $0x30] sm:$0xf]
      %v2372 = vld [vmem:[%s8 + $0x34] sm:$0xf]
      %v2373 = vld [vmem:[%s8 + $0x38] sm:$0xf]
      %v2374 = vld [vmem:[%s8 + $0x3c] sm:$0xf]
      %v2375 = vld [vmem:[%s8 + $0x40] sm:$0xf]
      %v2376 = vld [vmem:[%s8 + $0x44] sm:$0xf]
      %v2377 = vld [vmem:[%s9] sm:$0x1]
      %v2379 = vperm.slane %v2377, 0
      %v2384 = vrot.slane %v2354, 3
      %v2385 = vrot.slane %v2356, 3
      %v2386 = vsel %vm678, %v2384, %v2385
      %v2387 = vrot.slane %v1625, 3
      %v2388 = vrot.slane %v1634, 3
      %v2389 = vsel %vm678, %v2387, %v2388
      %v2390 = vrot.slane %v2358, 3
      %v2391 = vsel %vm678, %v2385, %v2390
      %v2392 = vrot.slane %v2316, 3
      %v2393 = vsel %vm678, %v2388, %v2392
      %v2415 = vunpack.c.l.b16 %v2359
      %v2416 = vunpack.c.l.b16 %v2360
      %v2417 = vunpack.c.l.b16 %v2361
      %v2418 = vunpack.c.l.b16 %v2362
      %v2419 = vunpack.c.l.b16 %v2363
      %v2420 = vunpack.c.l.b16 %v2364
      %v2421 = vunpack.c.l.b16 %v2365
      %v2422 = vunpack.c.l.b16 %v2366
      %v2423 = vunpack.c.l.b16 %v2367
      %v2424 = vunpack.c.l.b16 %v2368
      %v2425 = vunpack.c.l.b16 %v2369
      %v2426 = vunpack.c.l.b16 %v2370
      %v2427 = vunpack.c.l.b16 %v2371
      %v2428 = vunpack.c.l.b16 %v2372
      %v2429 = vunpack.c.l.b16 %v2373
      %v2430 = vunpack.c.l.b16 %v2374
      %v2431 = vunpack.c.l.b16 %v2375
      %v2432 = vunpack.c.l.b16 %v2376
      %v2433 = vpack.c.b16 %v2416, %v2415
      %v2434 = vpack.c.b16 %v2418, %v2417
      %v2435 = vpack.c.b16 %v2420, %v2419
      %v2436 = vpack.c.b16 %v2422, %v2421
      %v2437 = vpack.c.b16 %v2424, %v2423
      %v2438 = vpack.c.b16 %v2426, %v2425
      %v2439 = vpack.c.b16 %v2428, %v2427
      %v2440 = vpack.c.b16 %v2430, %v2429
      %v2441 = vpack.c.b16 %v2432, %v2431
      %v2452 = vsel %vm861, %v2389, 0
      %v2455 = vsel %vm861, %v2393, 0
      %v2458 = vsel %vm861, %v2392, 0
      %2460 = vmatpush.bf16.msra.mxu0 %v2440
      %2461 = vmatpush.bf16.msra.mxu0 %v2439
      %2462 = vmatpush.bf16.msra.mxu0 %v2438
      %2463 = vmatpush.bf16.msra.mxu0 %v2437
      %2464 = vmatpush.bf16.msra.mxu0 %v2436
      %2465 = vmatpush.bf16.msra.mxu0 %v2435
      %2466 = vmatpush.bf16.msra.mxu0 %v2434
      %2467 = vmatpush.bf16.msra.mxu0 %v2433
      %2468 = vmatmul.bf16.gmra.mxu0 %v2386
      %v2469 = vpop.f32.mrf.mxu0
      %v2470 = vadd.f32 %v2379, %v2469
      %v2471 = vpop.f32.mrf.mxu0
      %v2472 = vadd.f32 %v2379, %v2471
      %2473 = vmatmul.bf16.gmra.mxu0 %v2391
      %v2474 = vpop.f32.mrf.mxu0
      %v2475 = vadd.f32 %v2379, %v2474
      %v2476 = vpop.f32.mrf.mxu0
      %v2477 = vadd.f32 %v2379, %v2476
      %2478 = vmatmul.bf16.gmra.mxu0 %v2390
      %v2479 = vpop.f32.mrf.mxu0
      %v2480 = vadd.f32 %v2379, %v2479
      %v2481 = vpop.f32.mrf.mxu0
      %2482 = vdwg.mxu0
      %2483 = vmatpush.bf16.msra.mxu0 0
      %2484 = vmatpush.bf16.msra.mxu0 0
      %2485 = vmatpush.bf16.msra.mxu0 0
      %2486 = vmatpush.bf16.msra.mxu0 0
      %2487 = vmatpush.bf16.msra.mxu0 0
      %2488 = vmatpush.bf16.msra.mxu0 0
      %2489 = vmatpush.bf16.msra.mxu0 0
      %2490 = vmatpush.bf16.msra.mxu0 %v2441
      %2491 = vmatmul.bf16.gmra.mxu0 %v2452
      %v2492 = vpop.f32.mrf.mxu0
      %v2493 = vadd.f32 %v2470, %v2492
      %v2494 = vpop.f32.mrf.mxu0
      %v2495 = vadd.f32 %v2472, %v2494
      %2496 = vmatmul.bf16.gmra.mxu0 %v2455
      %v2497 = vpop.f32.mrf.mxu0
      %v2498 = vadd.f32 %v2475, %v2497
      %v2499 = vpop.f32.mrf.mxu0
      %v2500 = vadd.f32 %v2477, %v2499
      %2501 = vmatmul.bf16.gmra.mxu0 %v2458
      %v2502 = vpop.f32.mrf.mxu0
      %v2503 = vadd.f32 %v2480, %v2502
      %v2504 = vpop.f32.mrf.mxu0
      %2505 = vdwg.mxu0
      %v2506 = vmax.f32 %v2493, 0.0
      %v2507 = vmax.f32 %v2495, 0.0
      %v2508 = vmax.f32 %v2498, 0.0
      %v2509 = vmax.f32 %v2500, 0.0
      %v2510 = vmax.f32 %v2503, 0.0
      %v2511 = vpack.c.bf16 %v2507, %v2506
      %v2512 = vpack.c.bf16 %v2509, %v2508
      %v2513 = vpack.c.bf16 %v2510, %v2510
      %v2514 = vld [vmem:[%s10] sm:$0xf]
      %v2515 = vld [vmem:[%s10 + $0x4] sm:$0xf]
      %v2516 = vld [vmem:[%s11] sm:$0x1]
      %v2518 = vperm.slane %v2516, 0
      %v2522 = vunpack.c.l.b16 %v2514
      %v2523 = vunpack.c.l.b16 %v2515
      %v2524 = vpack.c.b16 %v2523, %v2522
      %v2527 = vsel %vm861, %v2511, 0
      %v2530 = vsel %vm861, %v2512, 0
      %v2533 = vsel %vm861, %v2513, 0
      %2535 = vmatpush.bf16.msra.mxu0 0
      %2536 = vmatpush.bf16.msra.mxu0 0
      %2537 = vmatpush.bf16.msra.mxu0 0
      %2538 = vmatpush.bf16.msra.mxu0 0
      %2539 = vmatpush.bf16.msra.mxu0 0
      %2540 = vmatpush.bf16.msra.mxu0 0
      %2541 = vmatpush.bf16.msra.mxu0 0
      %2542 = vmatpush.bf16.msra.mxu0 %v2524
      %2543 = vmatmul.bf16.gmra.mxu0 %v2527
      %v2544 = vpop.f32.mrf.mxu0
      %v2545 = vadd.f32 %v2518, %v2544
      %v2546 = vpop.f32.mrf.mxu0
      %v2547 = vadd.f32 %v2518, %v2546
      %2548 = vmatmul.bf16.gmra.mxu0 %v2530
      %v2549 = vpop.f32.mrf.mxu0
      %v2550 = vadd.f32 %v2518, %v2549
      %v2551 = vpop.f32.mrf.mxu0
      %v2552 = vadd.f32 %v2518, %v2551
      %2553 = vmatmul.bf16.gmra.mxu0 %v2533
      %v2554 = vpop.f32.mrf.mxu0
      %v2555 = vadd.f32 %v2518, %v2554
      %v2556 = vpop.f32.mrf.mxu0
      %2557 = vdwg.mxu0
      %s2558 = scalar_lea.vmem %s413, 80
      %2559 = vst.msk [vmem:[%s2558] sm:$0xff] %vm1913, %v2545
      %2560 = vst.msk [vmem:[%s2558 + $0x8] sm:$0xff] %vm1913, %v2547
      %2561 = vst.msk [vmem:[%s2558 + $0x10] sm:$0xff] %vm1913, %v2550
      %2562 = vst.msk [vmem:[%s2558 + $0x18] sm:$0xff] %vm1913, %v2552
      %2563 = vst.msk [vmem:[%s2558 + $0x20] sm:$0xf] %vm1918, %v2555
      %2564 = vrot.lane.b32.xlu0 %v1360, 16
      %v2565 = vpop.permute.xlu0 %2564
      %2566 = vrot.lane.b32.xlu0 %v1348, 16
      %v2567 = vpop.permute.xlu0 %2566
      %2568 = vrot.lane.b32.xlu0 %v1361, 16
      %v2569 = vpop.permute.xlu0 %2568
      %2570 = vrot.lane.b32.xlu0 %v2256, 32
      %v2571 = vpop.permute.xlu0 %2570
      %2572 = vrot.lane.b32.xlu0 %v2259, 32
      %v2573 = vpop.permute.xlu0 %2572
      %2574 = vrot.lane.b32.xlu0 %v2260, 32
      %v2575 = vpop.permute.xlu0 %2574
      %2576 = vrot.lane.b32.xlu0 %v1440, 48
      %v2577 = vpop.permute.xlu0 %2576
      %2578 = vrot.lane.b32.xlu0 %v1435, 48
      %v2579 = vpop.permute.xlu0 %2578
      %2580 = vrot.lane.b32.xlu0 %v1441, 48
      %v2581 = vpop.permute.xlu0 %2580
      %2582 = vrot.lane.b32.xlu0 %v1503, 64
      %v2583 = vpop.permute.xlu0 %2582
      %2584 = vrot.lane.b32.xlu0 %v1491, 64
      %v2585 = vpop.permute.xlu0 %2584
      %2586 = vrot.lane.b32.xlu0 %v1504, 64
      %v2587 = vpop.permute.xlu0 %2586
      %2588 = vrot.lane.b32.xlu0 %v1516, 80
      %v2589 = vpop.permute.xlu0 %2588
      %2590 = vrot.lane.b32.xlu0 %v1524, 80
      %v2591 = vpop.permute.xlu0 %2590
      %2592 = vrot.lane.b32.xlu0 %v1527, 80
      %v2593 = vpop.permute.xlu0 %2592
      %v2595 = vrot.slane 0, 3
      %v2596 = vsel %vm678, %v1937, %v2595
      %2597 = vrot.lane.b32.xlu0 %v1936, 96
      %v2598 = vpop.permute.xlu0 %2597
      %2599 = vrot.lane.b32.xlu0 %v1938, 96
      %v2600 = vpop.permute.xlu0 %2599
      %2601 = vrot.lane.b32.xlu0 %v2596, 96
      %v2602 = vpop.permute.xlu0 %2601
      %v2603 = vsel %vm678, %v1568, %v2595
      %2604 = vrot.lane.b32.xlu0 %v1567, 112
      %v2605 = vpop.permute.xlu0 %2604
      %2606 = vrot.lane.b32.xlu0 %v1569, 112
      %v2607 = vpop.permute.xlu0 %2606
      %2608 = vrot.lane.b32.xlu0 %v2603, 112
      %v2609 = vpop.permute.xlu0 %2608
      %v2610 = vshrl.u32 0, 16
      %v2612 = vrot.slane %v2610, 3
      %v2613 = vor.u32 %v2612, %v2308
      %v2614 = vsel %vm1576, %v1601, %v2613
      %v2616 = vsel %vm861, %v1265, %v2565
      %v2618 = vsel %vm861, %v1258, %v2567
      %v2620 = vsel %vm861, %v1268, %v2569
      %v2622 = vsel %vm508, %v2616, %v2571
      %v2624 = vsel %vm508, %v2618, %v2573
      %v2626 = vsel %vm508, %v2620, %v2575
      %v2628 = vsel %vm888, %v2622, %v2577
      %v2630 = vsel %vm888, %v2624, %v2579
      %v2632 = vsel %vm888, %v2626, %v2581
      %v2634 = vsel %vm902, %v2628, %v2583
      %v2636 = vsel %vm902, %v2630, %v2585
      %v2638 = vsel %vm902, %v2632, %v2587
      %v2640 = vsel %vm1706, %v2634, %v2589
      %v2642 = vsel %vm1706, %v2636, %v2591
      %v2644 = vsel %vm1706, %v2638, %v2593
      %v2646 = vsel %vm1713, %v2640, %v2598
      %v2648 = vsel %vm1713, %v2642, %v2600
      %v2650 = vsel %vm1713, %v2644, %v2602
      %v2652 = vsel %vm1720, %v2646, %v2605
      %v2654 = vsel %vm1720, %v2648, %v2607
      %v2656 = vsel %vm1720, %v2650, %v2609
      %v2657 = vld [vmem:[%s8] sm:$0xf]
      %v2658 = vld [vmem:[%s8 + $0x4] sm:$0xf]
      %v2659 = vld [vmem:[%s8 + $0x8] sm:$0xf]
      %v2660 = vld [vmem:[%s8 + $0xc] sm:$0xf]
      %v2661 = vld [vmem:[%s8 + $0x10] sm:$0xf]
      %v2662 = vld [vmem:[%s8 + $0x14] sm:$0xf]
      %v2663 = vld [vmem:[%s8 + $0x18] sm:$0xf]
      %v2664 = vld [vmem:[%s8 + $0x1c] sm:$0xf]
      %v2665 = vld [vmem:[%s8 + $0x20] sm:$0xf]
      %v2666 = vld [vmem:[%s8 + $0x24] sm:$0xf]
      %v2667 = vld [vmem:[%s8 + $0x28] sm:$0xf]
      %v2668 = vld [vmem:[%s8 + $0x2c] sm:$0xf]
      %v2669 = vld [vmem:[%s8 + $0x30] sm:$0xf]
      %v2670 = vld [vmem:[%s8 + $0x34] sm:$0xf]
      %v2671 = vld [vmem:[%s8 + $0x38] sm:$0xf]
      %v2672 = vld [vmem:[%s8 + $0x3c] sm:$0xf]
      %v2673 = vld [vmem:[%s8 + $0x40] sm:$0xf]
      %v2674 = vld [vmem:[%s8 + $0x44] sm:$0xf]
      %v2675 = vld [vmem:[%s9] sm:$0x1]
      %v2677 = vperm.slane %v2675, 0
      %v2679 = vshrl.u32 %v2652, 16
      %v2681 = vrot.slane %v2679, 3
      %v2682 = vshll.u32 %v2652, 16
      %v2684 = vrot.slane %v2682, 4
      %v2685 = vor.u32 %v2681, %v2684
      %v2686 = vshrl.u32 %v2654, 16
      %v2688 = vrot.slane %v2686, 3
      %v2689 = vshll.u32 %v2654, 16
      %v2691 = vrot.slane %v2689, 4
      %v2692 = vor.u32 %v2688, %v2691
      %v2693 = vsel %vm1576, %v2685, %v2692
      %v2695 = vshrl.u32 %v1593, 16
      %v2697 = vrot.slane %v2695, 3
      %v2698 = vshll.u32 %v1593, 16
      %v2700 = vrot.slane %v2698, 4
      %v2701 = vor.u32 %v2697, %v2700
      %v2703 = vshrl.u32 %v1602, 16
      %v2705 = vrot.slane %v2703, 3
      %v2706 = vshll.u32 %v1602, 16
      %v2708 = vrot.slane %v2706, 4
      %v2709 = vor.u32 %v2705, %v2708
      %v2710 = vsel %vm1576, %v2701, %v2709
      %v2711 = vshrl.u32 %v2656, 16
      %v2713 = vrot.slane %v2711, 3
      %v2714 = vshll.u32 %v2656, 16
      %v2716 = vrot.slane %v2714, 4
      %v2717 = vor.u32 %v2713, %v2716
      %v2718 = vsel %vm1576, %v2692, %v2717
      %v2720 = vshrl.u32 %v2614, 16
      %v2722 = vrot.slane %v2720, 3
      %v2723 = vshll.u32 %v2614, 16
      %v2725 = vrot.slane %v2723, 4
      %v2726 = vor.u32 %v2722, %v2725
      %v2727 = vsel %vm1576, %v2709, %v2726
      %v2749 = vunpack.c.l.b16 %v2657
      %v2750 = vunpack.c.l.b16 %v2658
      %v2751 = vunpack.c.l.b16 %v2659
      %v2752 = vunpack.c.l.b16 %v2660
      %v2753 = vunpack.c.l.b16 %v2661
      %v2754 = vunpack.c.l.b16 %v2662
      %v2755 = vunpack.c.l.b16 %v2663
      %v2756 = vunpack.c.l.b16 %v2664
      %v2757 = vunpack.c.l.b16 %v2665
      %v2758 = vunpack.c.l.b16 %v2666
      %v2759 = vunpack.c.l.b16 %v2667
      %v2760 = vunpack.c.l.b16 %v2668
      %v2761 = vunpack.c.l.b16 %v2669
      %v2762 = vunpack.c.l.b16 %v2670
      %v2763 = vunpack.c.l.b16 %v2671
      %v2764 = vunpack.c.l.b16 %v2672
      %v2765 = vunpack.c.l.b16 %v2673
      %v2766 = vunpack.c.l.b16 %v2674
      %v2767 = vpack.c.b16 %v2750, %v2749
      %v2768 = vpack.c.b16 %v2752, %v2751
      %v2769 = vpack.c.b16 %v2754, %v2753
      %v2770 = vpack.c.b16 %v2756, %v2755
      %v2771 = vpack.c.b16 %v2758, %v2757
      %v2772 = vpack.c.b16 %v2760, %v2759
      %v2773 = vpack.c.b16 %v2762, %v2761
      %v2774 = vpack.c.b16 %v2764, %v2763
      %v2775 = vpack.c.b16 %v2766, %v2765
      %v2786 = vsel %vm861, %v2710, 0
      %v2789 = vsel %vm861, %v2727, 0
      %v2792 = vsel %vm861, %v2726, 0
      %2794 = vmatpush.bf16.msra.mxu0 %v2774
      %2795 = vmatpush.bf16.msra.mxu0 %v2773
      %2796 = vmatpush.bf16.msra.mxu0 %v2772
      %2797 = vmatpush.bf16.msra.mxu0 %v2771
      %2798 = vmatpush.bf16.msra.mxu0 %v2770
      %2799 = vmatpush.bf16.msra.mxu0 %v2769
      %2800 = vmatpush.bf16.msra.mxu0 %v2768
      %2801 = vmatpush.bf16.msra.mxu0 %v2767
      %2802 = vmatmul.bf16.gmra.mxu0 %v2693
      %v2803 = vpop.f32.mrf.mxu0
      %v2804 = vadd.f32 %v2677, %v2803
      %v2805 = vpop.f32.mrf.mxu0
      %v2806 = vadd.f32 %v2677, %v2805
      %2807 = vmatmul.bf16.gmra.mxu0 %v2718
      %v2808 = vpop.f32.mrf.mxu0
      %v2809 = vadd.f32 %v2677, %v2808
      %v2810 = vpop.f32.mrf.mxu0
      %v2811 = vadd.f32 %v2677, %v2810
      %2812 = vmatmul.bf16.gmra.mxu0 %v2717
      %v2813 = vpop.f32.mrf.mxu0
      %v2814 = vadd.f32 %v2677, %v2813
      %v2815 = vpop.f32.mrf.mxu0
      %2816 = vdwg.mxu0
      %2817 = vmatpush.bf16.msra.mxu0 0
      %2818 = vmatpush.bf16.msra.mxu0 0
      %2819 = vmatpush.bf16.msra.mxu0 0
      %2820 = vmatpush.bf16.msra.mxu0 0
      %2821 = vmatpush.bf16.msra.mxu0 0
      %2822 = vmatpush.bf16.msra.mxu0 0
      %2823 = vmatpush.bf16.msra.mxu0 0
      %2824 = vmatpush.bf16.msra.mxu0 %v2775
      %2825 = vmatmul.bf16.gmra.mxu0 %v2786
      %v2826 = vpop.f32.mrf.mxu0
      %v2827 = vadd.f32 %v2804, %v2826
      %v2828 = vpop.f32.mrf.mxu0
      %v2829 = vadd.f32 %v2806, %v2828
      %2830 = vmatmul.bf16.gmra.mxu0 %v2789
      %v2831 = vpop.f32.mrf.mxu0
      %v2832 = vadd.f32 %v2809, %v2831
      %v2833 = vpop.f32.mrf.mxu0
      %v2834 = vadd.f32 %v2811, %v2833
      %2835 = vmatmul.bf16.gmra.mxu0 %v2792
      %v2836 = vpop.f32.mrf.mxu0
      %v2837 = vadd.f32 %v2814, %v2836
      %v2838 = vpop.f32.mrf.mxu0
      %2839 = vdwg.mxu0
      %v2840 = vmax.f32 %v2827, 0.0
      %v2841 = vmax.f32 %v2829, 0.0
      %v2842 = vmax.f32 %v2832, 0.0
      %v2843 = vmax.f32 %v2834, 0.0
      %v2844 = vmax.f32 %v2837, 0.0
      %v2845 = vpack.c.bf16 %v2841, %v2840
      %v2846 = vpack.c.bf16 %v2843, %v2842
      %v2847 = vpack.c.bf16 %v2844, %v2844
      %v2848 = vld [vmem:[%s10] sm:$0xf]
      %v2849 = vld [vmem:[%s10 + $0x4] sm:$0xf]
      %v2850 = vld [vmem:[%s11] sm:$0x1]
      %v2852 = vperm.slane %v2850, 0
      %v2856 = vunpack.c.l.b16 %v2848
      %v2857 = vunpack.c.l.b16 %v2849
      %v2858 = vpack.c.b16 %v2857, %v2856
      %v2861 = vsel %vm861, %v2845, 0
      %v2864 = vsel %vm861, %v2846, 0
      %v2867 = vsel %vm861, %v2847, 0
      %2869 = vmatpush.bf16.msra.mxu0 0
      %2870 = vmatpush.bf16.msra.mxu0 0
      %2871 = vmatpush.bf16.msra.mxu0 0
      %2872 = vmatpush.bf16.msra.mxu0 0
      %2873 = vmatpush.bf16.msra.mxu0 0
      %2874 = vmatpush.bf16.msra.mxu0 0
      %2875 = vmatpush.bf16.msra.mxu0 0
      %2876 = vmatpush.bf16.msra.mxu0 %v2858
      %2877 = vmatmul.bf16.gmra.mxu0 %v2861
      %v2878 = vpop.f32.mrf.mxu0
      %v2879 = vadd.f32 %v2852, %v2878
      %v2880 = vpop.f32.mrf.mxu0
      %v2881 = vadd.f32 %v2852, %v2880
      %2882 = vmatmul.bf16.gmra.mxu0 %v2864
      %v2883 = vpop.f32.mrf.mxu0
      %v2884 = vadd.f32 %v2852, %v2883
      %v2885 = vpop.f32.mrf.mxu0
      %v2886 = vadd.f32 %v2852, %v2885
      %2887 = vmatmul.bf16.gmra.mxu0 %v2867
      %v2888 = vpop.f32.mrf.mxu0
      %v2889 = vadd.f32 %v2852, %v2888
      %v2890 = vpop.f32.mrf.mxu0
      %2891 = vdwg.mxu0
      %s2892 = scalar_lea.vmem %s413, 120
      %2893 = vst.msk [vmem:[%s2892] sm:$0xff] %vm1913, %v2879
      %2894 = vst.msk [vmem:[%s2892 + $0x8] sm:$0xff] %vm1913, %v2881
      %2895 = vst.msk [vmem:[%s2892 + $0x10] sm:$0xff] %vm1913, %v2884
      %2896 = vst.msk [vmem:[%s2892 + $0x18] sm:$0xff] %vm1913, %v2886
      %2897 = vst.msk [vmem:[%s2892 + $0x20] sm:$0xf] %vm1918, %v2889
      %p2898 = scmp.lt.s32.totalorder %s23, 1
      %s2899 = scalar_select %p2898, %s23, 1
      %s2900 = smul.addr %s2899, 20
      %s2901 = smul.addr %s2900, 8
      %s2902 = scalar_lea.vmem %s12, %s2901
      // Predicated region
      $region69: #{_lambda_.1} parent=67 // pred_check
        %p2903 = pneg %p298
      $region70: #{_lambda_.1} parent=67 // pred_check_branch
        %2905 = sbr.rel (%p2903) target = $region72
      $region71: #{_lambda_.1} parent=67 // pred_region
        _
      $region72: #{_lambda_.1} parent=67 // pred_fallthru
        _
    $region68: #{_lambda_.1} parent=5 // pred_fallthru
      _
    %p2906 = scmp.le.s32.totalorder 2, %s18
    // Predicated region
    $region73: #{_lambda_.1} parent=5 // pred_check
      %p2907 = pneg %p2906
    $region74: #{_lambda_.1} parent=5 // pred_check_branch
      %2909 = sbr.rel (%p2907) target = $region76
    $region75: #{_lambda_.1} parent=5 // pred_region
      %s2910 = ssub.s32 %s18, 2
      // Predicated region
      $region77: #{_lambda_.1} parent=75 // pred_check
        %p2911 = pneg %p304
      $region78: #{_lambda_.1} parent=75 // pred_check_branch
        %2913 = sbr.rel (%p2911) target = $region80
      $region79: #{_lambda_.1} parent=75 // pred_region
        %p2914 = scmp.lt.s32.totalorder %s24, 1
        %s2915 = scalar_select %p2914, %s24, 1
        %s2916 = smul.addr %s2915, 20
        %s2917 = smul.addr %s2916, 8
        %s2918 = scalar_lea.vmem %s12, %s2917
      $region80: #{_lambda_.1} parent=75 // pred_fallthru
        _
    $region76: #{_lambda_.1} parent=5 // pred_fallthru
      _
  $region6: #{_lambda_.1} parent=0 // loop_footer
    %s22 = sadd.s32 1, %s18
  $region7: #{_lambda_.1} parent=0 // loop_footer_branch
    %17 = sbr.rel target = $region3
  $region8: #{_lambda_.1} parent=0 // loop_exit
    _

</llo_original>
